<compile_context>
chip_gen: v7x
topology: tpu7x:2x2x1
jax: 0.10.0
libtpu: 0.0.40
codegen_flags: <defaults>
</compile_context>

<pallas_src>
import numpy as np
import jax
import jax.numpy as jnp
from jax.experimental import pallas as pl
from jax.experimental.pallas import tpu as pltpu  # noqa: F401  (TPU-specific params if scaled up)

# ---- small, forward-consistent dims (scaled down from d_model=512 defaults) ----
D_MODEL = 64
D_K = 16
D_V = 16
H = 4
D_FF = 128
B = 2
NQ = 8     # decoder sequence length
NK = 16    # encoder sequence length

HD = H * D_K                      # 64 (== H*D_V == D_MODEL here)
NEG_INF = -1e9
LN_EPS = 1e-5
SCALE = 1.0 / float(np.sqrt(D_K))

# ----------------------- packed parameter slab layout -----------------------
# Weight slab: (64, 768) bf16, zero padding.  Every matrix has a 64-row input
# dim (W2 is split into two 64-row halves); matrices are packed along columns.
C_QKV = 0          # (64, 192)  [Wq*SCALE | Wk | Wv]   (self-attn)
C_OS = 192         # (64,  64)  Wo (self)
C_QE = 256         # (64,  64)  Wq*SCALE (cross)
C_KVE = 320        # (64, 128)  [Wk | Wv] (cross)
C_OE = 448         # (64,  64)  Wo (cross)
C_FF1 = 512        # (64, 128)  W1
C_FF2A = 640       # (64,  64)  W2[:64]
C_FF2B = 704       # (64,  64)  W2[64:]
W_COLS = 768

# Bias / LayerNorm slab: (13, 192) f32; vector v lives at [row_v, :width_v].
(R_BQKV_S, R_BO_S, R_BQ_E, R_BKV_E, R_BO_E, R_B1, R_B2,
 R_G_S, R_BETA_S, R_G_E, R_BETA_E, R_G_F, R_BETA_F) = range(13)
B_ROWS, B_COLS = 13, 192


# ------------------------------ kernel helpers ------------------------------
def _ln(x, gamma, beta):
    mu = jnp.mean(x, axis=-1, keepdims=True)
    var = jnp.mean(jnp.square(x - mu), axis=-1, keepdims=True)
    return (x - mu) * jax.lax.rsqrt(var + LN_EPS) * gamma + beta


# ------------------------------- Pallas kernel -------------------------------
def decoder_layer_kernel(x_ref, enc_ref, keep_ref, ms_ref, me_ref, w_ref, b_ref, o_ref):
    # x_ref:   (B*NQ, D_MODEL) f32      enc_ref: (B*NK, D_MODEL) f32
    # keep_ref:(B*NQ, 1) f32 (1.0 == keep row, 0.0 == padded row)
    # ms_ref:  (B*NQ, B*NQ) f32 additive mask (0.0 attend / NEG_INF masked, block-diag)
    # me_ref:  (B*NQ, B*NK) f32 additive mask
    # w_ref:   (64, 768) bf16 weight slab   b_ref: (13, 192) f32 bias/LN slab
    # o_ref:   (B*NQ, D_MODEL) f32
    xf = x_ref[...]
    keep = keep_ref[...]

    def wcols(c, width):
        return w_ref[:, c:c + width]                  # (64, width) bf16

    def brow(r, width):
        return b_ref[r:r + 1, :width]                 # (1, width) f32

    def proj(act_f32, c, width, r):
        # f32 activation -> bf16 operand, f32 accumulation, f32 bias add.
        return jnp.dot(act_f32.astype(jnp.bfloat16), wcols(c, width),
                       preferred_element_type=jnp.float32) + brow(r, width)

    def mha(q, k, v, add_mask):
        # Whole-batch multi-head attention; Q already carries the 1/sqrt(d_k)
        # scale (folded into the packed weights).  add_mask is block-diagonal
        # across examples, so one matmul per head covers the full batch.
        qb = q.astype(jnp.bfloat16)
        kb = k.astype(jnp.bfloat16)
        vb = v.astype(jnp.bfloat16)
        heads = []
        for h in range(H):
            qh = qb[:, h * D_K:(h + 1) * D_K]
            kh = kb[:, h * D_K:(h + 1) * D_K]
            vh = vb[:, h * D_V:(h + 1) * D_V]
            # contract last dims of both operands -> no explicit K transpose
            s = jax.lax.dot_general(qh, kh, (((1,), (1,)), ((), ())),
                                    preferred_element_type=jnp.float32) + add_mask
            s = s - jnp.max(s, axis=-1, keepdims=True)
            p = jnp.exp(s)
            p = p / jnp.sum(p, axis=-1, keepdims=True)          # exact division
            heads.append(jnp.dot(p.astype(jnp.bfloat16), vh,
                                 preferred_element_type=jnp.float32))
        return jnp.concatenate(heads, axis=-1)                  # (rows, H*D_V)

    # ---- self-attention block: fused QKV projection over the whole batch ----
    qkv = proj(xf, C_QKV, 3 * HD, R_BQKV_S)                     # (B*NQ, 192)
    sa = mha(qkv[:, :HD], qkv[:, HD:2 * HD], qkv[:, 2 * HD:], ms_ref[...])
    sa = proj(sa, C_OS, D_MODEL, R_BO_S)
    self_att = _ln(xf + sa, brow(R_G_S, D_MODEL), brow(R_BETA_S, D_MODEL)) * keep

    # ---- encoder (cross) attention block: fused KV projection of enc output ----
    q_e = proj(self_att, C_QE, HD, R_BQ_E)                      # (B*NQ, 64)
    kv_e = proj(enc_ref[...], C_KVE, 2 * HD, R_BKV_E)           # (B*NK, 128)
    ea = mha(q_e, kv_e[:, :HD], kv_e[:, HD:], me_ref[...])
    ea = proj(ea, C_OE, D_MODEL, R_BO_E)
    enc_att = _ln(self_att + ea, brow(R_G_E, D_MODEL), brow(R_BETA_E, D_MODEL)) * keep
    # torch applies masked_fill(mask_pad, 0) twice here; keep is 0/1 so one
    # multiply is equivalent (idempotent).

    # ---- position-wise feed forward: LN(x + fc2(relu(fc1(x)))) ----
    hdn = jnp.maximum(proj(enc_att, C_FF1, D_FF, R_B1), 0.0)    # (B*NQ, 128)
    hb = hdn.astype(jnp.bfloat16)
    ffo = (jnp.dot(hb[:, :D_MODEL], wcols(C_FF2A, D_MODEL),
                   preferred_element_type=jnp.float32)
           + jnp.dot(hb[:, D_MODEL:], wcols(C_FF2B, D_MODEL),
                     preferred_element_type=jnp.float32)
           + brow(R_B2, D_MODEL))
    o_ref[...] = _ln(enc_att + ffo, brow(R_G_F, D_MODEL), brow(R_BETA_F, D_MODEL))


# --------------------- host-side, init-time param packing --------------------
def pack_params(p):
    """Pack 26 small parameter arrays into two slabs ONCE at init (host numpy).

    * softmax scale 1/sqrt(d_k) is folded into the Q weight columns and Q bias.
    * weight slab is bf16 and has zero padding (W2 split into two 64-row halves).
    """
    def n(a):
        return np.asarray(a, np.float32)

    w = np.zeros((D_MODEL, W_COLS), np.float32)
    w[:, C_QKV:C_QKV + HD] = n(p["wq_s"]) * SCALE
    w[:, C_QKV + HD:C_QKV + 2 * HD] = n(p["wk_s"])
    w[:, C_QKV + 2 * HD:C_QKV + 3 * HD] = n(p["wv_s"])
    w[:, C_OS:C_OS + D_MODEL] = n(p["wo_s"])
    w[:, C_QE:C_QE + HD] = n(p["wq_e"]) * SCALE
    w[:, C_KVE:C_KVE + HD] = n(p["wk_e"])
    w[:, C_KVE + HD:C_KVE + 2 * HD] = n(p["wv_e"])
    w[:, C_OE:C_OE + D_MODEL] = n(p["wo_e"])
    w[:, C_FF1:C_FF1 + D_FF] = n(p["w1"])
    w[:, C_FF2A:C_FF2A + D_MODEL] = n(p["w2"])[:D_MODEL]
    w[:, C_FF2B:C_FF2B + D_MODEL] = n(p["w2"])[D_MODEL:]

    b = np.zeros((B_ROWS, B_COLS), np.float32)
    b[R_BQKV_S, :HD] = n(p["bq_s"])[0] * SCALE
    b[R_BQKV_S, HD:2 * HD] = n(p["bk_s"])[0]
    b[R_BQKV_S, 2 * HD:3 * HD] = n(p["bv_s"])[0]
    b[R_BO_S, :D_MODEL] = n(p["bo_s"])[0]
    b[R_BQ_E, :HD] = n(p["bq_e"])[0] * SCALE
    b[R_BKV_E, :HD] = n(p["bk_e"])[0]
    b[R_BKV_E, HD:2 * HD] = n(p["bv_e"])[0]
    b[R_BO_E, :D_MODEL] = n(p["bo_e"])[0]
    b[R_B1, :D_FF] = n(p["b1"])[0]
    b[R_B2, :D_MODEL] = n(p["b2"])[0]
    b[R_G_S, :D_MODEL] = n(p["g_s"])[0]
    b[R_BETA_S, :D_MODEL] = n(p["beta_s"])[0]
    b[R_G_E, :D_MODEL] = n(p["g_e"])[0]
    b[R_BETA_E, :D_MODEL] = n(p["beta_e"])[0]
    b[R_G_F, :D_MODEL] = n(p["g_f"])[0]
    b[R_BETA_F, :D_MODEL] = n(p["beta_f"])[0]

    return jnp.asarray(w, jnp.bfloat16), jnp.asarray(b, jnp.float32)


# ---------------------------------- wrapper ----------------------------------
def decoder_layer_pallas(x, enc, mask_pad, mask_self, mask_enc, w_slab, b_slab):
    bsz, nq, d = x.shape
    nk = enc.shape[1]

    # Layout plumbing in the wrapper: fold batch into rows so the kernel is a
    # single block of lane-dense (rows, D_MODEL) math with no grid.
    xf = x.reshape(bsz * nq, d)
    ef = enc.reshape(bsz * nk, d)
    keep = (1.0 - mask_pad).reshape(bsz * nq, 1).astype(jnp.float32)

    # Block-diagonal ADDITIVE masks: 0.0 == attend, NEG_INF == masked (either
    # by the original mask or because query/key belong to different examples).
    same = jnp.eye(bsz, dtype=jnp.float32)[:, None, :, None]          # (B,1,B,1)
    add_self = (1.0 - same * (1.0 - mask_self[:, :, None, :])) * NEG_INF
    add_self = add_self.reshape(bsz * nq, bsz * nq).astype(jnp.float32)
    me = mask_enc[:, 0, :][:, None, None, :]                          # (B,1,1,NK)
    add_enc = (1.0 - same * (1.0 - me)) * NEG_INF                     # (B,1,B,NK)
    add_enc = jnp.broadcast_to(add_enc, (bsz, nq, bsz, nk))
    add_enc = add_enc.reshape(bsz * nq, bsz * nk).astype(jnp.float32)

    bnq, bnk = bsz * nq, bsz * nk
    flops = 2 * (
        bnq * d * 3 * HD                                   # fused QKV (self)
        + H * (bnq * D_K * bnq + bnq * bnq * D_V)          # self scores + PV (batched)
        + bnq * HD * d                                     # Wo (self)
        + bnq * d * HD                                     # Wq (cross)
        + bnk * d * 2 * HD                                 # fused KV (cross)
        + H * (bnq * D_K * bnk + bnq * bnk * D_V)          # cross scores + PV
        + bnq * HD * d                                     # Wo (cross)
        + bnq * d * D_FF + bnq * D_FF * d)                 # FFN
    transcendentals = H * bnq * (bnq + bnk) + 3 * bnq
    bytes_accessed = (4 * (xf.size + ef.size + keep.size + add_self.size
                           + add_enc.size + b_slab.size + bnq * d)
                      + 2 * w_slab.size)                   # bf16 weight slab

    out = pl.pallas_call(
        decoder_layer_kernel,
        out_shape=jax.ShapeDtypeStruct((bnq, d), jnp.float32),
        cost_estimate=pl.CostEstimate(flops=flops,
                                      transcendentals=transcendentals,
                                      bytes_accessed=bytes_accessed),
    )(xf, ef, keep, add_self, add_enc, w_slab, b_slab)
    return out.reshape(bsz, nq, d)


# ------------------------------ parameter init --------------------------------
def make_params(key):
    ks = jax.random.split(key, 16)
    s = 0.1

    def lin(k, din, dout):
        kw, kb = jax.random.split(k)
        w = jax.random.normal(kw, (din, dout), jnp.float32) * s
        b = jax.random.normal(kb, (1, dout), jnp.float32) * s
        return w, b

    p = {}
    p["wq_s"], p["bq_s"] = lin(ks[0], D_MODEL, H * D_K)
    p["wk_s"], p["bk_s"] = lin(ks[1], D_MODEL, H * D_K)
    p["wv_s"], p["bv_s"] = lin(ks[2], D_MODEL, H * D_V)
    p["wo_s"], p["bo_s"] = lin(ks[3], H * D_V, D_MODEL)
    p["g_s"] = jnp.ones((1, D_MODEL), jnp.float32)
    p["beta_s"] = jnp.zeros((1, D_MODEL), jnp.float32)
    p["wq_e"], p["bq_e"] = lin(ks[4], D_MODEL, H * D_K)
    p["wk_e"], p["bk_e"] = lin(ks[5], D_MODEL, H * D_K)
    p["wv_e"], p["bv_e"] = lin(ks[6], D_MODEL, H * D_V)
    p["wo_e"], p["bo_e"] = lin(ks[7], H * D_V, D_MODEL)
    p["g_e"] = jnp.ones((1, D_MODEL), jnp.float32)
    p["beta_e"] = jnp.zeros((1, D_MODEL), jnp.float32)
    p["w1"], p["b1"] = lin(ks[8], D_MODEL, D_FF)
    p["w2"], p["b2"] = lin(ks[9], D_FF, D_MODEL)
    p["g_f"] = jnp.ones((1, D_MODEL), jnp.float32)
    p["beta_f"] = jnp.zeros((1, D_MODEL), jnp.float32)
    return p


# ------------------------------ pure-JAX reference ----------------------------
def _mha_ref(q_in, k_in, v_in, mask, wq, bq, wk, bk, wv, bv, wo, bo):
    q = q_in @ wq + bq
    k = k_in @ wk + bk
    v = v_in @ wv + bv
    o_acc = jnp.zeros((q_in.shape[0], D_MODEL), jnp.float32)
    for h in range(H):
        qh = q[:, h * D_K:(h + 1) * D_K]
        kh = k[:, h * D_K:(h + 1) * D_K]
        vh = v[:, h * D_V:(h + 1) * D_V]
        s = (qh @ kh.T) * SCALE
        s = jnp.where(mask > 0.5, NEG_INF, s)
        s = s - jnp.max(s, axis=-1, keepdims=True)
        p = jnp.exp(s)
        p = p / jnp.sum(p, axis=-1, keepdims=True)
        o_acc = o_acc + (p @ vh) @ wo[h * D_V:(h + 1) * D_V, :]
    return o_acc + bo


def _decoder_one_ref(x, enc, mask_pad, mask_self, mask_enc, p):
    sa = _mha_ref(x, x, x, mask_self, p["wq_s"], p["bq_s"], p["wk_s"], p["bk_s"],
                  p["wv_s"], p["bv_s"], p["wo_s"], p["bo_s"])
    self_att = _ln(x + sa, p["g_s"], p["beta_s"])
    self_att = jnp.where(mask_pad > 0.5, 0.0, self_att)
    ea = _mha_ref(self_att, enc, enc, mask_enc, p["wq_e"], p["bq_e"], p["wk_e"],
                  p["bk_e"], p["wv_e"], p["bv_e"], p["wo_e"], p["bo_e"])
    enc_att = _ln(self_att + ea, p["g_e"], p["beta_e"])
    enc_att = jnp.where(mask_pad > 0.5, 0.0, enc_att)
    hdn = jnp.maximum(enc_att @ p["w1"] + p["b1"], 0.0)
    ffo = hdn @ p["w2"] + p["b2"]
    return _ln(enc_att + ffo, p["g_f"], p["beta_f"])


def decoder_layer_ref(x, enc, mask_pad, mask_self, mask_enc, params):
    fn = lambda xb, eb, mp, ms, me: _decoder_one_ref(xb, eb, mp, ms, me, params)
    return jax.vmap(fn)(x, enc, mask_pad, mask_self, mask_enc)


# ------------------------------------ main ------------------------------------
if __name__ == "__main__":
    key = jax.random.PRNGKey(0)
    k_x, k_enc, k_p = jax.random.split(key, 3)

    x = jax.random.normal(k_x, (B, NQ, D_MODEL), jnp.float32)
    enc_output = jax.random.normal(k_enc, (B, NK, D_MODEL), jnp.float32)
    params = make_params(k_p)

    # pack once at init -> cached device slabs (not in the per-call path)
    w_slab, b_slab = pack_params(params)
    jax.block_until_ready((w_slab, b_slab))

    # masks (float, 1.0 == masked)
    dec_lens = np.array([NQ, 5])
    enc_lens = np.array([NK, 12])
    q_pos = np.arange(NQ)
    k_pos = np.arange(NK)
    # mask_pad: (B, NQ, 1) — True where decoder position is padding
    mask_pad = (q_pos[None, :, None] >= dec_lens[:, None, None]).astype(np.float32)
    # mask_self_att: causal OR decoder key padding, (B, NQ, NQ)
    causal = (q_pos[None, :] > q_pos[:, None])
    pad_k = (q_pos[None, None, :] >= dec_lens[:, None, None])
    mask_self = (causal[None, :, :] | pad_k).astype(np.float32)
    # mask_enc_att: encoder key padding, (B, 1, NK)
    mask_enc = (k_pos[None, None, :] >= enc_lens[:, None, None]).astype(np.float32)

    mask_pad = jnp.asarray(mask_pad)
    mask_self = jnp.asarray(mask_self)
    mask_enc = jnp.asarray(mask_enc)

    out = decoder_layer_pallas(x, enc_output, mask_pad, mask_self, mask_enc,
                               w_slab, b_slab)
    out = jax.block_until_ready(out)

    ref = decoder_layer_ref(x, enc_output, mask_pad, mask_self, mask_enc, params)
    ref = jax.block_until_ready(ref)

    assert out.shape == (B, NQ, D_MODEL)
    # tolerance absorbs bf16 weight/operand rounding (kernel uses a bf16 slab,
    # f32 accumulation); reference is full f32.
    assert np.allclose(np.asarray(out), np.asarray(ref), atol=3e-2, rtol=3e-2)

    print("KERNEL_OK")
</pallas_src>

<mosaic_0001>
module attributes {stable_mosaic.version = 11 : i64} {
  func.func @decoder_layer_kernel(%arg0: memref<16x64xf32, #tpu.memory_space<vmem>>, %arg1: memref<32x64xf32, #tpu.memory_space<vmem>>, %arg2: memref<16x1xf32, #tpu.memory_space<vmem>>, %arg3: memref<16x16xf32, #tpu.memory_space<vmem>>, %arg4: memref<16x32xf32, #tpu.memory_space<vmem>>, %arg5: memref<64x768xbf16, #tpu.memory_space<vmem>>, %arg6: memref<13x192xf32, #tpu.memory_space<vmem>>, %arg7: memref<16x64xf32, #tpu.memory_space<vmem>>) attributes {dimension_semantics = [], scalar_prefetch = 0 : i64, scratch_operands = 0 : i64, tpu.core_type = #tpu.core_type<tc>} {
    %c0 = arith.constant 0 : index
    %c0_0 = arith.constant 0 : index
    %0 = vector.load %arg0[%c0, %c0_0] : memref<16x64xf32, #tpu.memory_space<vmem>>, vector<16x64xf32>
    %c0_1 = arith.constant 0 : index
    %c0_2 = arith.constant 0 : index
    %1 = vector.load %arg2[%c0_1, %c0_2] : memref<16x1xf32, #tpu.memory_space<vmem>>, vector<16x1xf32>
    %2 = arith.truncf %0 : vector<16x64xf32> to vector<16x64xbf16>
    %c0_3 = arith.constant 0 : index
    %c0_4 = arith.constant 0 : index
    %3 = vector.load %arg5[%c0_3, %c0_4] : memref<64x768xbf16, #tpu.memory_space<vmem>>, vector<64x192xbf16>
    %cst = arith.constant dense<0.000000e+00> : vector<16x192xf32>
    %4 = tpu.matmul %2, %3, %cst {dimension_numbers = #tpu.dot_dimension_numbers<[1], [0], [0], [1], [0, 0, 1, 1], [], []>} : vector<16x64xbf16>, vector<64x192xbf16>, vector<16x192xf32> -> vector<16x192xf32>
    %c0_5 = arith.constant 0 : index
    %c0_6 = arith.constant 0 : index
    %5 = vector.load %arg6[%c0_5, %c0_6] : memref<13x192xf32, #tpu.memory_space<vmem>>, vector<1x192xf32>
    %6 = vector.broadcast %5 : vector<1x192xf32> to vector<16x192xf32>
    %7 = arith.addf %4, %6 : vector<16x192xf32>
    %8 = vector.extract_strided_slice %7 {offsets = [0, 0], sizes = [16, 64], strides = [1, 1]} : vector<16x192xf32> to vector<16x64xf32>
    %9 = vector.extract_strided_slice %7 {offsets = [0, 64], sizes = [16, 64], strides = [1, 1]} : vector<16x192xf32> to vector<16x64xf32>
    %10 = vector.extract_strided_slice %7 {offsets = [0, 128], sizes = [16, 64], strides = [1, 1]} : vector<16x192xf32> to vector<16x64xf32>
    %c0_7 = arith.constant 0 : index
    %c0_8 = arith.constant 0 : index
    %11 = vector.load %arg3[%c0_7, %c0_8] : memref<16x16xf32, #tpu.memory_space<vmem>>, vector<16x16xf32>
    %12 = arith.truncf %8 : vector<16x64xf32> to vector<16x64xbf16>
    %13 = arith.truncf %9 : vector<16x64xf32> to vector<16x64xbf16>
    %14 = arith.truncf %10 : vector<16x64xf32> to vector<16x64xbf16>
    %15 = vector.extract_strided_slice %12 {offsets = [0, 0], sizes = [16, 16], strides = [1, 1]} : vector<16x64xbf16> to vector<16x16xbf16>
    %16 = vector.extract_strided_slice %13 {offsets = [0, 0], sizes = [16, 16], strides = [1, 1]} : vector<16x64xbf16> to vector<16x16xbf16>
    %17 = vector.extract_strided_slice %14 {offsets = [0, 0], sizes = [16, 16], strides = [1, 1]} : vector<16x64xbf16> to vector<16x16xbf16>
    %cst_9 = arith.constant dense<0.000000e+00> : vector<16x16xf32>
    %18 = tpu.matmul %15, %16, %cst_9 {dimension_numbers = #tpu.dot_dimension_numbers<[1], [1], [0], [0], [0, 0, 1, 0], [], []>} : vector<16x16xbf16>, vector<16x16xbf16>, vector<16x16xf32> -> vector<16x16xf32>
    %19 = arith.addf %18, %11 : vector<16x16xf32>
    %cst_10 = arith.constant dense<0xFF800000> : vector<16xf32>
    %20 = vector.multi_reduction <maximumf>, %19, %cst_10 [1] : vector<16x16xf32> to vector<16xf32>
    %21 = vector.shape_cast %20 : vector<16xf32> to vector<16x1xf32>
    %22 = vector.broadcast %21 : vector<16x1xf32> to vector<16x16xf32>
    %23 = arith.subf %19, %22 : vector<16x16xf32>
    %24 = math.exp %23 : vector<16x16xf32>
    %cst_11 = arith.constant dense<0.000000e+00> : vector<16xf32>
    %25 = vector.multi_reduction <add>, %24, %cst_11 [1] : vector<16x16xf32> to vector<16xf32>
    %26 = vector.shape_cast %25 : vector<16xf32> to vector<16x1xf32>
    %27 = vector.broadcast %26 : vector<16x1xf32> to vector<16x16xf32>
    %28 = arith.divf %24, %27 : vector<16x16xf32>
    %29 = arith.truncf %28 : vector<16x16xf32> to vector<16x16xbf16>
    %cst_12 = arith.constant dense<0.000000e+00> : vector<16x16xf32>
    %30 = tpu.matmul %29, %17, %cst_12 {dimension_numbers = #tpu.dot_dimension_numbers<[1], [0], [0], [1], [0, 0, 1, 1], [], []>} : vector<16x16xbf16>, vector<16x16xbf16>, vector<16x16xf32> -> vector<16x16xf32>
    %31 = vector.extract_strided_slice %12 {offsets = [0, 16], sizes = [16, 16], strides = [1, 1]} : vector<16x64xbf16> to vector<16x16xbf16>
    %32 = vector.extract_strided_slice %13 {offsets = [0, 16], sizes = [16, 16], strides = [1, 1]} : vector<16x64xbf16> to vector<16x16xbf16>
    %33 = vector.extract_strided_slice %14 {offsets = [0, 16], sizes = [16, 16], strides = [1, 1]} : vector<16x64xbf16> to vector<16x16xbf16>
    %cst_13 = arith.constant dense<0.000000e+00> : vector<16x16xf32>
    %34 = tpu.matmul %31, %32, %cst_13 {dimension_numbers = #tpu.dot_dimension_numbers<[1], [1], [0], [0], [0, 0, 1, 0], [], []>} : vector<16x16xbf16>, vector<16x16xbf16>, vector<16x16xf32> -> vector<16x16xf32>
    %35 = arith.addf %34, %11 : vector<16x16xf32>
    %cst_14 = arith.constant dense<0xFF800000> : vector<16xf32>
    %36 = vector.multi_reduction <maximumf>, %35, %cst_14 [1] : vector<16x16xf32> to vector<16xf32>
    %37 = vector.shape_cast %36 : vector<16xf32> to vector<16x1xf32>
    %38 = vector.broadcast %37 : vector<16x1xf32> to vector<16x16xf32>
    %39 = arith.subf %35, %38 : vector<16x16xf32>
    %40 = math.exp %39 : vector<16x16xf32>
    %cst_15 = arith.constant dense<0.000000e+00> : vector<16xf32>
    %41 = vector.multi_reduction <add>, %40, %cst_15 [1] : vector<16x16xf32> to vector<16xf32>
    %42 = vector.shape_cast %41 : vector<16xf32> to vector<16x1xf32>
    %43 = vector.broadcast %42 : vector<16x1xf32> to vector<16x16xf32>
    %44 = arith.divf %40, %43 : vector<16x16xf32>
    %45 = arith.truncf %44 : vector<16x16xf32> to vector<16x16xbf16>
    %cst_16 = arith.constant dense<0.000000e+00> : vector<16x16xf32>
    %46 = tpu.matmul %45, %33, %cst_16 {dimension_numbers = #tpu.dot_dimension_numbers<[1], [0], [0], [1], [0, 0, 1, 1], [], []>} : vector<16x16xbf16>, vector<16x16xbf16>, vector<16x16xf32> -> vector<16x16xf32>
    %47 = vector.extract_strided_slice %12 {offsets = [0, 32], sizes = [16, 16], strides = [1, 1]} : vector<16x64xbf16> to vector<16x16xbf16>
    %48 = vector.extract_strided_slice %13 {offsets = [0, 32], sizes = [16, 16], strides = [1, 1]} : vector<16x64xbf16> to vector<16x16xbf16>
    %49 = vector.extract_strided_slice %14 {offsets = [0, 32], sizes = [16, 16], strides = [1, 1]} : vector<16x64xbf16> to vector<16x16xbf16>
    %cst_17 = arith.constant dense<0.000000e+00> : vector<16x16xf32>
    %50 = tpu.matmul %47, %48, %cst_17 {dimension_numbers = #tpu.dot_dimension_numbers<[1], [1], [0], [0], [0, 0, 1, 0], [], []>} : vector<16x16xbf16>, vector<16x16xbf16>, vector<16x16xf32> -> vector<16x16xf32>
    %51 = arith.addf %50, %11 : vector<16x16xf32>
    %cst_18 = arith.constant dense<0xFF800000> : vector<16xf32>
    %52 = vector.multi_reduction <maximumf>, %51, %cst_18 [1] : vector<16x16xf32> to vector<16xf32>
    %53 = vector.shape_cast %52 : vector<16xf32> to vector<16x1xf32>
    %54 = vector.broadcast %53 : vector<16x1xf32> to vector<16x16xf32>
    %55 = arith.subf %51, %54 : vector<16x16xf32>
    %56 = math.exp %55 : vector<16x16xf32>
    %cst_19 = arith.constant dense<0.000000e+00> : vector<16xf32>
    %57 = vector.multi_reduction <add>, %56, %cst_19 [1] : vector<16x16xf32> to vector<16xf32>
    %58 = vector.shape_cast %57 : vector<16xf32> to vector<16x1xf32>
    %59 = vector.broadcast %58 : vector<16x1xf32> to vector<16x16xf32>
    %60 = arith.divf %56, %59 : vector<16x16xf32>
    %61 = arith.truncf %60 : vector<16x16xf32> to vector<16x16xbf16>
    %cst_20 = arith.constant dense<0.000000e+00> : vector<16x16xf32>
    %62 = tpu.matmul %61, %49, %cst_20 {dimension_numbers = #tpu.dot_dimension_numbers<[1], [0], [0], [1], [0, 0, 1, 1], [], []>} : vector<16x16xbf16>, vector<16x16xbf16>, vector<16x16xf32> -> vector<16x16xf32>
    %63 = vector.extract_strided_slice %12 {offsets = [0, 48], sizes = [16, 16], strides = [1, 1]} : vector<16x64xbf16> to vector<16x16xbf16>
    %64 = vector.extract_strided_slice %13 {offsets = [0, 48], sizes = [16, 16], strides = [1, 1]} : vector<16x64xbf16> to vector<16x16xbf16>
    %65 = vector.extract_strided_slice %14 {offsets = [0, 48], sizes = [16, 16], strides = [1, 1]} : vector<16x64xbf16> to vector<16x16xbf16>
    %cst_21 = arith.constant dense<0.000000e+00> : vector<16x16xf32>
    %66 = tpu.matmul %63, %64, %cst_21 {dimension_numbers = #tpu.dot_dimension_numbers<[1], [1], [0], [0], [0, 0, 1, 0], [], []>} : vector<16x16xbf16>, vector<16x16xbf16>, vector<16x16xf32> -> vector<16x16xf32>
    %67 = arith.addf %66, %11 : vector<16x16xf32>
    %cst_22 = arith.constant dense<0xFF800000> : vector<16xf32>
    %68 = vector.multi_reduction <maximumf>, %67, %cst_22 [1] : vector<16x16xf32> to vector<16xf32>
    %69 = vector.shape_cast %68 : vector<16xf32> to vector<16x1xf32>
    %70 = vector.broadcast %69 : vector<16x1xf32> to vector<16x16xf32>
    %71 = arith.subf %67, %70 : vector<16x16xf32>
    %72 = math.exp %71 : vector<16x16xf32>
    %cst_23 = arith.constant dense<0.000000e+00> : vector<16xf32>
    %73 = vector.multi_reduction <add>, %72, %cst_23 [1] : vector<16x16xf32> to vector<16xf32>
    %74 = vector.shape_cast %73 : vector<16xf32> to vector<16x1xf32>
    %75 = vector.broadcast %74 : vector<16x1xf32> to vector<16x16xf32>
    %76 = arith.divf %72, %75 : vector<16x16xf32>
    %77 = arith.truncf %76 : vector<16x16xf32> to vector<16x16xbf16>
    %cst_24 = arith.constant dense<0.000000e+00> : vector<16x16xf32>
    %78 = tpu.matmul %77, %65, %cst_24 {dimension_numbers = #tpu.dot_dimension_numbers<[1], [0], [0], [1], [0, 0, 1, 1], [], []>} : vector<16x16xbf16>, vector<16x16xbf16>, vector<16x16xf32> -> vector<16x16xf32>
    %79 = tpu.concatenate %30, %46, %62, %78 in 1 : vector<16x16xf32>, vector<16x16xf32>, vector<16x16xf32>, vector<16x16xf32> -> vector<16x64xf32>
    %80 = arith.truncf %79 : vector<16x64xf32> to vector<16x64xbf16>
    %c0_25 = arith.constant 0 : index
    %c192 = arith.constant 192 : index
    %81 = vector.load %arg5[%c0_25, %c192] : memref<64x768xbf16, #tpu.memory_space<vmem>>, vector<64x64xbf16>
    %cst_26 = arith.constant dense<0.000000e+00> : vector<16x64xf32>
    %82 = tpu.matmul %80, %81, %cst_26 {dimension_numbers = #tpu.dot_dimension_numbers<[1], [0], [0], [1], [0, 0, 1, 1], [], []>} : vector<16x64xbf16>, vector<64x64xbf16>, vector<16x64xf32> -> vector<16x64xf32>
    %c1 = arith.constant 1 : index
    %c0_27 = arith.constant 0 : index
    %83 = vector.load %arg6[%c1, %c0_27] : memref<13x192xf32, #tpu.memory_space<vmem>>, vector<1x64xf32>
    %84 = vector.broadcast %83 : vector<1x64xf32> to vector<16x64xf32>
    %85 = arith.addf %82, %84 : vector<16x64xf32>
    %86 = arith.addf %0, %85 : vector<16x64xf32>
    %c7 = arith.constant 7 : index
    %c0_28 = arith.constant 0 : index
    %87 = vector.load %arg6[%c7, %c0_28] : memref<13x192xf32, #tpu.memory_space<vmem>>, vector<1x64xf32>
    %c8 = arith.constant 8 : index
    %c0_29 = arith.constant 0 : index
    %88 = vector.load %arg6[%c8, %c0_29] : memref<13x192xf32, #tpu.memory_space<vmem>>, vector<1x64xf32>
    %cst_30 = arith.constant dense<0.000000e+00> : vector<16xf32>
    %89 = vector.multi_reduction <add>, %86, %cst_30 [1] : vector<16x64xf32> to vector<16xf32>
    %90 = vector.shape_cast %89 : vector<16xf32> to vector<16x1xf32>
    %cst_31 = arith.constant 6.400000e+01 : f32
    %91 = vector.broadcast %cst_31 : f32 to vector<16x1xf32>
    %92 = arith.divf %90, %91 : vector<16x1xf32>
    %93 = vector.broadcast %92 : vector<16x1xf32> to vector<16x64xf32>
    %94 = arith.subf %86, %93 : vector<16x64xf32>
    %95 = arith.mulf %94, %94 : vector<16x64xf32>
    %cst_32 = arith.constant dense<0.000000e+00> : vector<16xf32>
    %96 = vector.multi_reduction <add>, %95, %cst_32 [1] : vector<16x64xf32> to vector<16xf32>
    %97 = vector.shape_cast %96 : vector<16xf32> to vector<16x1xf32>
    %cst_33 = arith.constant 6.400000e+01 : f32
    %98 = vector.broadcast %cst_33 : f32 to vector<16x1xf32>
    %99 = arith.divf %97, %98 : vector<16x1xf32>
    %100 = vector.broadcast %92 : vector<16x1xf32> to vector<16x64xf32>
    %101 = arith.subf %86, %100 : vector<16x64xf32>
    %cst_34 = arith.constant 9.99999974E-6 : f32
    %102 = vector.broadcast %cst_34 : f32 to vector<16x1xf32>
    %103 = arith.addf %99, %102 : vector<16x1xf32>
    %104 = math.rsqrt %103 : vector<16x1xf32>
    %105 = vector.broadcast %104 : vector<16x1xf32> to vector<16x64xf32>
    %106 = arith.mulf %101, %105 : vector<16x64xf32>
    %107 = vector.broadcast %87 : vector<1x64xf32> to vector<16x64xf32>
    %108 = arith.mulf %106, %107 : vector<16x64xf32>
    %109 = vector.broadcast %88 : vector<1x64xf32> to vector<16x64xf32>
    %110 = arith.addf %108, %109 : vector<16x64xf32>
    %111 = vector.broadcast %1 : vector<16x1xf32> to vector<16x64xf32>
    %112 = arith.mulf %110, %111 : vector<16x64xf32>
    %113 = arith.truncf %112 : vector<16x64xf32> to vector<16x64xbf16>
    %c0_35 = arith.constant 0 : index
    %c256 = arith.constant 256 : index
    %114 = vector.load %arg5[%c0_35, %c256] : memref<64x768xbf16, #tpu.memory_space<vmem>>, vector<64x64xbf16>
    %cst_36 = arith.constant dense<0.000000e+00> : vector<16x64xf32>
    %115 = tpu.matmul %113, %114, %cst_36 {dimension_numbers = #tpu.dot_dimension_numbers<[1], [0], [0], [1], [0, 0, 1, 1], [], []>} : vector<16x64xbf16>, vector<64x64xbf16>, vector<16x64xf32> -> vector<16x64xf32>
    %c2 = arith.constant 2 : index
    %c0_37 = arith.constant 0 : index
    %116 = vector.load %arg6[%c2, %c0_37] : memref<13x192xf32, #tpu.memory_space<vmem>>, vector<1x64xf32>
    %117 = vector.broadcast %116 : vector<1x64xf32> to vector<16x64xf32>
    %118 = arith.addf %115, %117 : vector<16x64xf32>
    %c0_38 = arith.constant 0 : index
    %c0_39 = arith.constant 0 : index
    %119 = vector.load %arg1[%c0_38, %c0_39] : memref<32x64xf32, #tpu.memory_space<vmem>>, vector<32x64xf32>
    %120 = arith.truncf %119 : vector<32x64xf32> to vector<32x64xbf16>
    %c0_40 = arith.constant 0 : index
    %c320 = arith.constant 320 : index
    %121 = vector.load %arg5[%c0_40, %c320] : memref<64x768xbf16, #tpu.memory_space<vmem>>, vector<64x128xbf16>
    %cst_41 = arith.constant dense<0.000000e+00> : vector<32x128xf32>
    %122 = tpu.matmul %120, %121, %cst_41 {dimension_numbers = #tpu.dot_dimension_numbers<[1], [0], [0], [1], [0, 0, 1, 1], [], []>} : vector<32x64xbf16>, vector<64x128xbf16>, vector<32x128xf32> -> vector<32x128xf32>
    %c3 = arith.constant 3 : index
    %c0_42 = arith.constant 0 : index
    %123 = vector.load %arg6[%c3, %c0_42] : memref<13x192xf32, #tpu.memory_space<vmem>>, vector<1x128xf32>
    %124 = vector.broadcast %123 : vector<1x128xf32> to vector<32x128xf32>
    %125 = arith.addf %122, %124 : vector<32x128xf32>
    %126 = vector.extract_strided_slice %125 {offsets = [0, 0], sizes = [32, 64], strides = [1, 1]} : vector<32x128xf32> to vector<32x64xf32>
    %127 = vector.extract_strided_slice %125 {offsets = [0, 64], sizes = [32, 64], strides = [1, 1]} : vector<32x128xf32> to vector<32x64xf32>
    %c0_43 = arith.constant 0 : index
    %c0_44 = arith.constant 0 : index
    %128 = vector.load %arg4[%c0_43, %c0_44] : memref<16x32xf32, #tpu.memory_space<vmem>>, vector<16x32xf32>
    %129 = arith.truncf %118 : vector<16x64xf32> to vector<16x64xbf16>
    %130 = arith.truncf %126 : vector<32x64xf32> to vector<32x64xbf16>
    %131 = arith.truncf %127 : vector<32x64xf32> to vector<32x64xbf16>
    %132 = vector.extract_strided_slice %129 {offsets = [0, 0], sizes = [16, 16], strides = [1, 1]} : vector<16x64xbf16> to vector<16x16xbf16>
    %133 = vector.extract_strided_slice %130 {offsets = [0, 0], sizes = [32, 16], strides = [1, 1]} : vector<32x64xbf16> to vector<32x16xbf16>
    %134 = vector.extract_strided_slice %131 {offsets = [0, 0], sizes = [32, 16], strides = [1, 1]} : vector<32x64xbf16> to vector<32x16xbf16>
    %cst_45 = arith.constant dense<0.000000e+00> : vector<16x32xf32>
    %135 = tpu.matmul %132, %133, %cst_45 {dimension_numbers = #tpu.dot_dimension_numbers<[1], [1], [0], [0], [0, 0, 1, 0], [], []>} : vector<16x16xbf16>, vector<32x16xbf16>, vector<16x32xf32> -> vector<16x32xf32>
    %136 = arith.addf %135, %128 : vector<16x32xf32>
    %cst_46 = arith.constant dense<0xFF800000> : vector<16xf32>
    %137 = vector.multi_reduction <maximumf>, %136, %cst_46 [1] : vector<16x32xf32> to vector<16xf32>
    %138 = vector.shape_cast %137 : vector<16xf32> to vector<16x1xf32>
    %139 = vector.broadcast %138 : vector<16x1xf32> to vector<16x32xf32>
    %140 = arith.subf %136, %139 : vector<16x32xf32>
    %141 = math.exp %140 : vector<16x32xf32>
    %cst_47 = arith.constant dense<0.000000e+00> : vector<16xf32>
    %142 = vector.multi_reduction <add>, %141, %cst_47 [1] : vector<16x32xf32> to vector<16xf32>
    %143 = vector.shape_cast %142 : vector<16xf32> to vector<16x1xf32>
    %144 = vector.broadcast %143 : vector<16x1xf32> to vector<16x32xf32>
    %145 = arith.divf %141, %144 : vector<16x32xf32>
    %146 = arith.truncf %145 : vector<16x32xf32> to vector<16x32xbf16>
    %cst_48 = arith.constant dense<0.000000e+00> : vector<16x16xf32>
    %147 = tpu.matmul %146, %134, %cst_48 {dimension_numbers = #tpu.dot_dimension_numbers<[1], [0], [0], [1], [0, 0, 1, 1], [], []>} : vector<16x32xbf16>, vector<32x16xbf16>, vector<16x16xf32> -> vector<16x16xf32>
    %148 = vector.extract_strided_slice %129 {offsets = [0, 16], sizes = [16, 16], strides = [1, 1]} : vector<16x64xbf16> to vector<16x16xbf16>
    %149 = vector.extract_strided_slice %130 {offsets = [0, 16], sizes = [32, 16], strides = [1, 1]} : vector<32x64xbf16> to vector<32x16xbf16>
    %150 = vector.extract_strided_slice %131 {offsets = [0, 16], sizes = [32, 16], strides = [1, 1]} : vector<32x64xbf16> to vector<32x16xbf16>
    %cst_49 = arith.constant dense<0.000000e+00> : vector<16x32xf32>
    %151 = tpu.matmul %148, %149, %cst_49 {dimension_numbers = #tpu.dot_dimension_numbers<[1], [1], [0], [0], [0, 0, 1, 0], [], []>} : vector<16x16xbf16>, vector<32x16xbf16>, vector<16x32xf32> -> vector<16x32xf32>
    %152 = arith.addf %151, %128 : vector<16x32xf32>
    %cst_50 = arith.constant dense<0xFF800000> : vector<16xf32>
    %153 = vector.multi_reduction <maximumf>, %152, %cst_50 [1] : vector<16x32xf32> to vector<16xf32>
    %154 = vector.shape_cast %153 : vector<16xf32> to vector<16x1xf32>
    %155 = vector.broadcast %154 : vector<16x1xf32> to vector<16x32xf32>
    %156 = arith.subf %152, %155 : vector<16x32xf32>
    %157 = math.exp %156 : vector<16x32xf32>
    %cst_51 = arith.constant dense<0.000000e+00> : vector<16xf32>
    %158 = vector.multi_reduction <add>, %157, %cst_51 [1] : vector<16x32xf32> to vector<16xf32>
    %159 = vector.shape_cast %158 : vector<16xf32> to vector<16x1xf32>
    %160 = vector.broadcast %159 : vector<16x1xf32> to vector<16x32xf32>
    %161 = arith.divf %157, %160 : vector<16x32xf32>
    %162 = arith.truncf %161 : vector<16x32xf32> to vector<16x32xbf16>
    %cst_52 = arith.constant dense<0.000000e+00> : vector<16x16xf32>
    %163 = tpu.matmul %162, %150, %cst_52 {dimension_numbers = #tpu.dot_dimension_numbers<[1], [0], [0], [1], [0, 0, 1, 1], [], []>} : vector<16x32xbf16>, vector<32x16xbf16>, vector<16x16xf32> -> vector<16x16xf32>
    %164 = vector.extract_strided_slice %129 {offsets = [0, 32], sizes = [16, 16], strides = [1, 1]} : vector<16x64xbf16> to vector<16x16xbf16>
    %165 = vector.extract_strided_slice %130 {offsets = [0, 32], sizes = [32, 16], strides = [1, 1]} : vector<32x64xbf16> to vector<32x16xbf16>
    %166 = vector.extract_strided_slice %131 {offsets = [0, 32], sizes = [32, 16], strides = [1, 1]} : vector<32x64xbf16> to vector<32x16xbf16>
    %cst_53 = arith.constant dense<0.000000e+00> : vector<16x32xf32>
    %167 = tpu.matmul %164, %165, %cst_53 {dimension_numbers = #tpu.dot_dimension_numbers<[1], [1], [0], [0], [0, 0, 1, 0], [], []>} : vector<16x16xbf16>, vector<32x16xbf16>, vector<16x32xf32> -> vector<16x32xf32>
    %168 = arith.addf %167, %128 : vector<16x32xf32>
    %cst_54 = arith.constant dense<0xFF800000> : vector<16xf32>
    %169 = vector.multi_reduction <maximumf>, %168, %cst_54 [1] : vector<16x32xf32> to vector<16xf32>
    %170 = vector.shape_cast %169 : vector<16xf32> to vector<16x1xf32>
    %171 = vector.broadcast %170 : vector<16x1xf32> to vector<16x32xf32>
    %172 = arith.subf %168, %171 : vector<16x32xf32>
    %173 = math.exp %172 : vector<16x32xf32>
    %cst_55 = arith.constant dense<0.000000e+00> : vector<16xf32>
    %174 = vector.multi_reduction <add>, %173, %cst_55 [1] : vector<16x32xf32> to vector<16xf32>
    %175 = vector.shape_cast %174 : vector<16xf32> to vector<16x1xf32>
    %176 = vector.broadcast %175 : vector<16x1xf32> to vector<16x32xf32>
    %177 = arith.divf %173, %176 : vector<16x32xf32>
    %178 = arith.truncf %177 : vector<16x32xf32> to vector<16x32xbf16>
    %cst_56 = arith.constant dense<0.000000e+00> : vector<16x16xf32>
    %179 = tpu.matmul %178, %166, %cst_56 {dimension_numbers = #tpu.dot_dimension_numbers<[1], [0], [0], [1], [0, 0, 1, 1], [], []>} : vector<16x32xbf16>, vector<32x16xbf16>, vector<16x16xf32> -> vector<16x16xf32>
    %180 = vector.extract_strided_slice %129 {offsets = [0, 48], sizes = [16, 16], strides = [1, 1]} : vector<16x64xbf16> to vector<16x16xbf16>
    %181 = vector.extract_strided_slice %130 {offsets = [0, 48], sizes = [32, 16], strides = [1, 1]} : vector<32x64xbf16> to vector<32x16xbf16>
    %182 = vector.extract_strided_slice %131 {offsets = [0, 48], sizes = [32, 16], strides = [1, 1]} : vector<32x64xbf16> to vector<32x16xbf16>
    %cst_57 = arith.constant dense<0.000000e+00> : vector<16x32xf32>
    %183 = tpu.matmul %180, %181, %cst_57 {dimension_numbers = #tpu.dot_dimension_numbers<[1], [1], [0], [0], [0, 0, 1, 0], [], []>} : vector<16x16xbf16>, vector<32x16xbf16>, vector<16x32xf32> -> vector<16x32xf32>
    %184 = arith.addf %183, %128 : vector<16x32xf32>
    %cst_58 = arith.constant dense<0xFF800000> : vector<16xf32>
    %185 = vector.multi_reduction <maximumf>, %184, %cst_58 [1] : vector<16x32xf32> to vector<16xf32>
    %186 = vector.shape_cast %185 : vector<16xf32> to vector<16x1xf32>
    %187 = vector.broadcast %186 : vector<16x1xf32> to vector<16x32xf32>
    %188 = arith.subf %184, %187 : vector<16x32xf32>
    %189 = math.exp %188 : vector<16x32xf32>
    %cst_59 = arith.constant dense<0.000000e+00> : vector<16xf32>
    %190 = vector.multi_reduction <add>, %189, %cst_59 [1] : vector<16x32xf32> to vector<16xf32>
    %191 = vector.shape_cast %190 : vector<16xf32> to vector<16x1xf32>
    %192 = vector.broadcast %191 : vector<16x1xf32> to vector<16x32xf32>
    %193 = arith.divf %189, %192 : vector<16x32xf32>
    %194 = arith.truncf %193 : vector<16x32xf32> to vector<16x32xbf16>
    %cst_60 = arith.constant dense<0.000000e+00> : vector<16x16xf32>
    %195 = tpu.matmul %194, %182, %cst_60 {dimension_numbers = #tpu.dot_dimension_numbers<[1], [0], [0], [1], [0, 0, 1, 1], [], []>} : vector<16x32xbf16>, vector<32x16xbf16>, vector<16x16xf32> -> vector<16x16xf32>
    %196 = tpu.concatenate %147, %163, %179, %195 in 1 : vector<16x16xf32>, vector<16x16xf32>, vector<16x16xf32>, vector<16x16xf32> -> vector<16x64xf32>
    %197 = arith.truncf %196 : vector<16x64xf32> to vector<16x64xbf16>
    %c0_61 = arith.constant 0 : index
    %c448 = arith.constant 448 : index
    %198 = vector.load %arg5[%c0_61, %c448] : memref<64x768xbf16, #tpu.memory_space<vmem>>, vector<64x64xbf16>
    %cst_62 = arith.constant dense<0.000000e+00> : vector<16x64xf32>
    %199 = tpu.matmul %197, %198, %cst_62 {dimension_numbers = #tpu.dot_dimension_numbers<[1], [0], [0], [1], [0, 0, 1, 1], [], []>} : vector<16x64xbf16>, vector<64x64xbf16>, vector<16x64xf32> -> vector<16x64xf32>
    %c4 = arith.constant 4 : index
    %c0_63 = arith.constant 0 : index
    %200 = vector.load %arg6[%c4, %c0_63] : memref<13x192xf32, #tpu.memory_space<vmem>>, vector<1x64xf32>
    %201 = vector.broadcast %200 : vector<1x64xf32> to vector<16x64xf32>
    %202 = arith.addf %199, %201 : vector<16x64xf32>
    %203 = arith.addf %112, %202 : vector<16x64xf32>
    %c9 = arith.constant 9 : index
    %c0_64 = arith.constant 0 : index
    %204 = vector.load %arg6[%c9, %c0_64] : memref<13x192xf32, #tpu.memory_space<vmem>>, vector<1x64xf32>
    %c10 = arith.constant 10 : index
    %c0_65 = arith.constant 0 : index
    %205 = vector.load %arg6[%c10, %c0_65] : memref<13x192xf32, #tpu.memory_space<vmem>>, vector<1x64xf32>
    %cst_66 = arith.constant dense<0.000000e+00> : vector<16xf32>
    %206 = vector.multi_reduction <add>, %203, %cst_66 [1] : vector<16x64xf32> to vector<16xf32>
    %207 = vector.shape_cast %206 : vector<16xf32> to vector<16x1xf32>
    %cst_67 = arith.constant 6.400000e+01 : f32
    %208 = vector.broadcast %cst_67 : f32 to vector<16x1xf32>
    %209 = arith.divf %207, %208 : vector<16x1xf32>
    %210 = vector.broadcast %209 : vector<16x1xf32> to vector<16x64xf32>
    %211 = arith.subf %203, %210 : vector<16x64xf32>
    %212 = arith.mulf %211, %211 : vector<16x64xf32>
    %cst_68 = arith.constant dense<0.000000e+00> : vector<16xf32>
    %213 = vector.multi_reduction <add>, %212, %cst_68 [1] : vector<16x64xf32> to vector<16xf32>
    %214 = vector.shape_cast %213 : vector<16xf32> to vector<16x1xf32>
    %cst_69 = arith.constant 6.400000e+01 : f32
    %215 = vector.broadcast %cst_69 : f32 to vector<16x1xf32>
    %216 = arith.divf %214, %215 : vector<16x1xf32>
    %217 = vector.broadcast %209 : vector<16x1xf32> to vector<16x64xf32>
    %218 = arith.subf %203, %217 : vector<16x64xf32>
    %cst_70 = arith.constant 9.99999974E-6 : f32
    %219 = vector.broadcast %cst_70 : f32 to vector<16x1xf32>
    %220 = arith.addf %216, %219 : vector<16x1xf32>
    %221 = math.rsqrt %220 : vector<16x1xf32>
    %222 = vector.broadcast %221 : vector<16x1xf32> to vector<16x64xf32>
    %223 = arith.mulf %218, %222 : vector<16x64xf32>
    %224 = vector.broadcast %204 : vector<1x64xf32> to vector<16x64xf32>
    %225 = arith.mulf %223, %224 : vector<16x64xf32>
    %226 = vector.broadcast %205 : vector<1x64xf32> to vector<16x64xf32>
    %227 = arith.addf %225, %226 : vector<16x64xf32>
    %228 = vector.broadcast %1 : vector<16x1xf32> to vector<16x64xf32>
    %229 = arith.mulf %227, %228 : vector<16x64xf32>
    %230 = arith.truncf %229 : vector<16x64xf32> to vector<16x64xbf16>
    %c0_71 = arith.constant 0 : index
    %c512 = arith.constant 512 : index
    %231 = vector.load %arg5[%c0_71, %c512] : memref<64x768xbf16, #tpu.memory_space<vmem>>, vector<64x128xbf16>
    %cst_72 = arith.constant dense<0.000000e+00> : vector<16x128xf32>
    %232 = tpu.matmul %230, %231, %cst_72 {dimension_numbers = #tpu.dot_dimension_numbers<[1], [0], [0], [1], [0, 0, 1, 1], [], []>} : vector<16x64xbf16>, vector<64x128xbf16>, vector<16x128xf32> -> vector<16x128xf32>
    %c5 = arith.constant 5 : index
    %c0_73 = arith.constant 0 : index
    %233 = vector.load %arg6[%c5, %c0_73] : memref<13x192xf32, #tpu.memory_space<vmem>>, vector<1x128xf32>
    %234 = vector.broadcast %233 : vector<1x128xf32> to vector<16x128xf32>
    %235 = arith.addf %232, %234 : vector<16x128xf32>
    %cst_74 = arith.constant 0.000000e+00 : f32
    %236 = vector.broadcast %cst_74 : f32 to vector<16x128xf32>
    %237 = arith.maximumf %235, %236 : vector<16x128xf32>
    %238 = arith.truncf %237 : vector<16x128xf32> to vector<16x128xbf16>
    %239 = vector.extract_strided_slice %238 {offsets = [0, 0], sizes = [16, 64], strides = [1, 1]} : vector<16x128xbf16> to vector<16x64xbf16>
    %c0_75 = arith.constant 0 : index
    %c640 = arith.constant 640 : index
    %240 = vector.load %arg5[%c0_75, %c640] : memref<64x768xbf16, #tpu.memory_space<vmem>>, vector<64x64xbf16>
    %cst_76 = arith.constant dense<0.000000e+00> : vector<16x64xf32>
    %241 = tpu.matmul %239, %240, %cst_76 {dimension_numbers = #tpu.dot_dimension_numbers<[1], [0], [0], [1], [0, 0, 1, 1], [], []>} : vector<16x64xbf16>, vector<64x64xbf16>, vector<16x64xf32> -> vector<16x64xf32>
    %242 = vector.extract_strided_slice %238 {offsets = [0, 64], sizes = [16, 64], strides = [1, 1]} : vector<16x128xbf16> to vector<16x64xbf16>
    %c0_77 = arith.constant 0 : index
    %c704 = arith.constant 704 : index
    %243 = vector.load %arg5[%c0_77, %c704] : memref<64x768xbf16, #tpu.memory_space<vmem>>, vector<64x64xbf16>
    %cst_78 = arith.constant dense<0.000000e+00> : vector<16x64xf32>
    %244 = tpu.matmul %242, %243, %cst_78 {dimension_numbers = #tpu.dot_dimension_numbers<[1], [0], [0], [1], [0, 0, 1, 1], [], []>} : vector<16x64xbf16>, vector<64x64xbf16>, vector<16x64xf32> -> vector<16x64xf32>
    %245 = arith.addf %241, %244 : vector<16x64xf32>
    %c6 = arith.constant 6 : index
    %c0_79 = arith.constant 0 : index
    %246 = vector.load %arg6[%c6, %c0_79] : memref<13x192xf32, #tpu.memory_space<vmem>>, vector<1x64xf32>
    %247 = vector.broadcast %246 : vector<1x64xf32> to vector<16x64xf32>
    %248 = arith.addf %245, %247 : vector<16x64xf32>
    %249 = arith.addf %229, %248 : vector<16x64xf32>
    %c11 = arith.constant 11 : index
    %c0_80 = arith.constant 0 : index
    %250 = vector.load %arg6[%c11, %c0_80] : memref<13x192xf32, #tpu.memory_space<vmem>>, vector<1x64xf32>
    %c12 = arith.constant 12 : index
    %c0_81 = arith.constant 0 : index
    %251 = vector.load %arg6[%c12, %c0_81] : memref<13x192xf32, #tpu.memory_space<vmem>>, vector<1x64xf32>
    %cst_82 = arith.constant dense<0.000000e+00> : vector<16xf32>
    %252 = vector.multi_reduction <add>, %249, %cst_82 [1] : vector<16x64xf32> to vector<16xf32>
    %253 = vector.shape_cast %252 : vector<16xf32> to vector<16x1xf32>
    %cst_83 = arith.constant 6.400000e+01 : f32
    %254 = vector.broadcast %cst_83 : f32 to vector<16x1xf32>
    %255 = arith.divf %253, %254 : vector<16x1xf32>
    %256 = vector.broadcast %255 : vector<16x1xf32> to vector<16x64xf32>
    %257 = arith.subf %249, %256 : vector<16x64xf32>
    %258 = arith.mulf %257, %257 : vector<16x64xf32>
    %cst_84 = arith.constant dense<0.000000e+00> : vector<16xf32>
    %259 = vector.multi_reduction <add>, %258, %cst_84 [1] : vector<16x64xf32> to vector<16xf32>
    %260 = vector.shape_cast %259 : vector<16xf32> to vector<16x1xf32>
    %cst_85 = arith.constant 6.400000e+01 : f32
    %261 = vector.broadcast %cst_85 : f32 to vector<16x1xf32>
    %262 = arith.divf %260, %261 : vector<16x1xf32>
    %263 = vector.broadcast %255 : vector<16x1xf32> to vector<16x64xf32>
    %264 = arith.subf %249, %263 : vector<16x64xf32>
    %cst_86 = arith.constant 9.99999974E-6 : f32
    %265 = vector.broadcast %cst_86 : f32 to vector<16x1xf32>
    %266 = arith.addf %262, %265 : vector<16x1xf32>
    %267 = math.rsqrt %266 : vector<16x1xf32>
    %268 = vector.broadcast %267 : vector<16x1xf32> to vector<16x64xf32>
    %269 = arith.mulf %264, %268 : vector<16x64xf32>
    %270 = vector.broadcast %250 : vector<1x64xf32> to vector<16x64xf32>
    %271 = arith.mulf %269, %270 : vector<16x64xf32>
    %272 = vector.broadcast %251 : vector<1x64xf32> to vector<16x64xf32>
    %273 = arith.addf %271, %272 : vector<16x64xf32>
    %c0_87 = arith.constant 0 : index
    %c0_88 = arith.constant 0 : index
    %274 = vector.load %arg7[%c0_87, %c0_88] : memref<16x64xf32, #tpu.memory_space<vmem>>, vector<16x64xf32>
    tpu.vector_store %arg7[%c0_87, %c0_88], %273 {strides = array<i32>} : memref<16x64xf32, #tpu.memory_space<vmem>>, vector<16x64xf32>,
    return
  }
}

</mosaic_0001>

<llo_original>
// kernel: tpu_custom_call.1
$region0: #{tpu_custom_call.1}
  #allocation0 [shape = 'u32[]', space=smem, size = 0x4, offset = 0x4, fixed_abs, tag = 'smem constant byte address 0x4 - core index']
  #allocation1 [shape = 'u32[144,128]{1,0:T(1,128)}', space=vmem, size = 0x12000, scoped, tag = 'internal scratch']
  %s0 = inlined_call_operand.hbm [shape: f32[16,64], index: 0, kind: input, shape index: {}]
  %s1 = inlined_call_operand.hbm [shape: f32[32,64], index: 1, kind: input, shape index: {}]
  %s2 = inlined_call_operand.vmem [shape: f32[16,1], index: 2, kind: input, shape index: {}]
  %s3 = inlined_call_operand.hbm [shape: f32[16,16], index: 3, kind: input, shape index: {}]
  %s4 = inlined_call_operand.hbm [shape: f32[16,32], index: 4, kind: input, shape index: {}]
  %s5 = inlined_call_operand.hbm [shape: bf16[64,768], index: 5, kind: input, shape index: {}]
  %s6 = inlined_call_operand.vmem [shape: f32[13,192], index: 6, kind: input, shape index: {}]
  %s7 = inlined_call_operand.hbm [shape: f32[16,64], index: 7, kind: output, shape index: {}]
  %s8 = sld [smem:[#allocation0]]
  $region58: #{tpu_custom_call.1} parent=0
    _
  %s10 = ssub.s32 1, %s8
  %s11 = scalar_select 0, %s10, %s8
  $region1: #{tpu_custom_call.1} parent=0
    #allocation2 [shape = 'u8[8192]{0}', space=vmem, size = 0x2000, scoped, tag = 'input window, operand 0, single buffered']
    #allocation3 [shape = 's32[1]{0}', space=sflag, size = 0x4, scoped, tag = 'scoped memory for tpu_custom_call.1']
    #allocation4 [shape = 's32[1]{0}', space=sflag, size = 0x4, scoped, tag = 'scoped memory for tpu_custom_call.1']
    #allocation5 [shape = 'u8[16384]{0}', space=vmem, size = 0x4000, scoped, tag = 'input window, operand 1, single buffered']
    #allocation6 [shape = 's32[1]{0}', space=sflag, size = 0x4, scoped, tag = 'scoped memory for tpu_custom_call.1']
    #allocation7 [shape = 'u8[8192]{0}', space=vmem, size = 0x2000, scoped, tag = 'input window, operand 3, single buffered']
    #allocation8 [shape = 'u8[8192]{0}', space=vmem, size = 0x2000, scoped, tag = 'input window, operand 4, single buffered']
    #allocation9 [shape = 's32[1]{0}', space=sflag, size = 0x4, scoped, tag = 'scoped memory for tpu_custom_call.1']
    #allocation10 [shape = 'u8[98304]{0}', space=vmem, size = 0x18000, scoped, tag = 'input window, operand 5, single buffered']
    #allocation11 [shape = 'u8[8192]{0}', space=vmem, size = 0x2000, scoped, tag = 'output window, operand 0, single buffered']
    %12 = vsyncpa [#allocation3], 0
    %13 = vsyncpa [#allocation6], 0
    %14 = vsyncpa [#allocation9], 0
    %15 = vsyncpa [#allocation4], 0
    // Predicated region
    $region2: #{tpu_custom_call.1} parent=1 // pred_check
      _
    $region3: #{tpu_custom_call.1} parent=1 // pred_check_branch
      %17 = sbr.rel (0) target = $region5
    $region4: #{tpu_custom_call.1} parent=1 // pred_region
      %s19 = ssub.s32 256, 256
      %20 = vsyncadd [#allocation3], %s19
      %s21 = sshll.u32 [#allocation2], 4
      %s22 = int_to_ptr.vmem [resolvable:$true] %s21
      %27 = dma.hbm_to_vmem [thread:$0]  %s0, 256, %s22, [#allocation3], 128, 128, 8
    $region5: #{tpu_custom_call.1} parent=1 // pred_fallthru
      _
    // Predicated region
    $region6: #{tpu_custom_call.1} parent=1 // pred_check
      _
    $region7: #{tpu_custom_call.1} parent=1 // pred_check_branch
      %29 = sbr.rel (0) target = $region9
    $region8: #{tpu_custom_call.1} parent=1 // pred_region
      %s31 = ssub.s32 512, 512
      %32 = vsyncadd [#allocation6], %s31
      %s33 = sshll.u32 [#allocation5], 4
      %s34 = int_to_ptr.vmem [resolvable:$true] %s33
      %39 = dma.hbm_to_vmem [thread:$0]  %s1, 512, %s34, [#allocation6], 128, 128, 8
    $region9: #{tpu_custom_call.1} parent=1 // pred_fallthru
      _
    // Predicated region
    $region10: #{tpu_custom_call.1} parent=1 // pred_check
      _
    $region11: #{tpu_custom_call.1} parent=1 // pred_check_branch
      %41 = sbr.rel (0) target = $region13
    $region12: #{tpu_custom_call.1} parent=1 // pred_region
      _
    $region13: #{tpu_custom_call.1} parent=1 // pred_fallthru
      _
    // Predicated region
    $region14: #{tpu_custom_call.1} parent=1 // pred_check
      _
    $region15: #{tpu_custom_call.1} parent=1 // pred_check_branch
      %43 = sbr.rel (0) target = $region17
    $region16: #{tpu_custom_call.1} parent=1 // pred_region
      %s45 = ssub.s32 256, 256
      %46 = vsyncadd [#allocation6], %s45
      %s47 = sshll.u32 [#allocation7], 4
      %s48 = int_to_ptr.vmem [resolvable:$true] %s47
      %53 = dma.hbm_to_vmem [thread:$0]  %s3, 256, %s48, [#allocation6], 128, 128, 8
    $region17: #{tpu_custom_call.1} parent=1 // pred_fallthru
      _
    // Predicated region
    $region18: #{tpu_custom_call.1} parent=1 // pred_check
      _
    $region19: #{tpu_custom_call.1} parent=1 // pred_check_branch
      %55 = sbr.rel (0) target = $region21
    $region20: #{tpu_custom_call.1} parent=1 // pred_region
      %s57 = ssub.s32 256, 256
      %58 = vsyncadd [#allocation9], %s57
      %s59 = sshll.u32 [#allocation8], 4
      %s60 = int_to_ptr.vmem [resolvable:$true] %s59
      %65 = dma.hbm_to_vmem [thread:$0]  %s4, 256, %s60, [#allocation9], 128, 128, 8
    $region21: #{tpu_custom_call.1} parent=1 // pred_fallthru
      _
    // Predicated region
    $region22: #{tpu_custom_call.1} parent=1 // pred_check
      _
    $region23: #{tpu_custom_call.1} parent=1 // pred_check_branch
      %67 = sbr.rel (0) target = $region25
    $region24: #{tpu_custom_call.1} parent=1 // pred_region
      %s69 = ssub.s32 3072, 3072
      %70 = vsyncadd [#allocation9], %s69
      %s71 = sshll.u32 [#allocation10], 4
      %s72 = int_to_ptr.vmem [resolvable:$true] %s71
      %77 = dma.hbm_to_vmem [thread:$0]  %s5, 3072, %s72, [#allocation9], 384, 384, 24
    $region25: #{tpu_custom_call.1} parent=1 // pred_fallthru
      _
    // Predicated region
    $region26: #{tpu_custom_call.1} parent=1 // pred_check
      _
    $region27: #{tpu_custom_call.1} parent=1 // pred_check_branch
      %79 = sbr.rel (0) target = $region29
    $region28: #{tpu_custom_call.1} parent=1 // pred_region
      _
    $region29: #{tpu_custom_call.1} parent=1 // pred_fallthru
      _
    // Predicated region
    $region30: #{tpu_custom_call.1} parent=1 // pred_check
      _
    $region31: #{tpu_custom_call.1} parent=1 // pred_check_branch
      %81 = sbr.rel (0) target = $region33
    $region32: #{tpu_custom_call.1} parent=1 // pred_region
      %82 = dma.done [#allocation3], 256
    $region33: #{tpu_custom_call.1} parent=1 // pred_fallthru
      _
    // Predicated region
    $region34: #{tpu_custom_call.1} parent=1 // pred_check
      _
    $region35: #{tpu_custom_call.1} parent=1 // pred_check_branch
      %84 = sbr.rel (0) target = $region37
    $region36: #{tpu_custom_call.1} parent=1 // pred_region
      %85 = dma.done [#allocation6], 512
    $region37: #{tpu_custom_call.1} parent=1 // pred_fallthru
      _
    // Predicated region
    $region38: #{tpu_custom_call.1} parent=1 // pred_check
      _
    $region39: #{tpu_custom_call.1} parent=1 // pred_check_branch
      %87 = sbr.rel (0) target = $region41
    $region40: #{tpu_custom_call.1} parent=1 // pred_region
      %88 = dma.done [#allocation6], 256
    $region41: #{tpu_custom_call.1} parent=1 // pred_fallthru
      _
    // Predicated region
    $region42: #{tpu_custom_call.1} parent=1 // pred_check
      _
    $region43: #{tpu_custom_call.1} parent=1 // pred_check_branch
      %90 = sbr.rel (0) target = $region45
    $region44: #{tpu_custom_call.1} parent=1 // pred_region
      %91 = dma.done [#allocation9], 256
    $region45: #{tpu_custom_call.1} parent=1 // pred_fallthru
      _
    // Predicated region
    $region46: #{tpu_custom_call.1} parent=1 // pred_check
      _
    $region47: #{tpu_custom_call.1} parent=1 // pred_check_branch
      %93 = sbr.rel (0) target = $region49
    $region48: #{tpu_custom_call.1} parent=1 // pred_region
      %94 = dma.done [#allocation9], 3072
    $region49: #{tpu_custom_call.1} parent=1 // pred_fallthru
      _
    %v96 = vld [vmem:[#allocation2] sm:$0xff]
    %v97 = vld [vmem:[#allocation2 + $0x8] sm:$0xff]
    %v98 = vld [vmem:[%s2] sm:$0xff]
    %v99 = vld [vmem:[%s2 + $0x8] sm:$0xff]
    %v100 = vpack.c.bf16 %v97, %v96
    %v101 = vld [vmem:[#allocation10] sm:$0xff]
    %v102 = vld [vmem:[#allocation10 + $0x18] sm:$0xff]
    %v103 = vld [vmem:[#allocation10 + $0x30] sm:$0xff]
    %v104 = vld [vmem:[#allocation10 + $0x48] sm:$0xff]
    %v105 = vld [vmem:[#allocation10 + $0x60] sm:$0xff]
    %v106 = vld [vmem:[#allocation10 + $0x78] sm:$0xff]
    %v107 = vld [vmem:[#allocation10 + $0x90] sm:$0xff]
    %v108 = vld [vmem:[#allocation10 + $0xa8] sm:$0xff]
    %v109 = vld [vmem:[%s6] ss:$8 sm:$0x3]
    %v111 = vlaneseq
    %v112 = vshrl.u32 %v111, 7
    %v113 = vsub.s32 0, %v112
    %v114 = vrot.slane %v109, %v113
    %v115 = vlaneseq
    %v116 = vshrl.u32 %v115, 7
    %v117 = vsub.s32 1, %v116
    %v118 = vrot.slane %v109, %v117
    %v129 = vunpack.c.l.b16 %v101
    %v130 = vunpack.c.h.b16 %v101
    %v131 = vunpack.c.l.b16 %v102
    %v132 = vunpack.c.h.b16 %v102
    %v133 = vunpack.c.l.b16 %v103
    %v134 = vunpack.c.h.b16 %v103
    %v135 = vunpack.c.l.b16 %v104
    %v136 = vunpack.c.h.b16 %v104
    %v137 = vunpack.c.l.b16 %v105
    %v138 = vunpack.c.h.b16 %v105
    %v139 = vunpack.c.l.b16 %v106
    %v140 = vunpack.c.h.b16 %v106
    %v141 = vunpack.c.l.b16 %v107
    %v142 = vunpack.c.h.b16 %v107
    %v143 = vunpack.c.l.b16 %v108
    %v144 = vunpack.c.h.b16 %v108
    %v145 = vpack.c.b16 %v131, %v129
    %v146 = vpack.c.b16 %v132, %v130
    %v147 = vpack.c.b16 %v135, %v133
    %v148 = vpack.c.b16 %v136, %v134
    %v149 = vpack.c.b16 %v139, %v137
    %v150 = vpack.c.b16 %v140, %v138
    %v151 = vpack.c.b16 %v143, %v141
    %v152 = vpack.c.b16 %v144, %v142
    %vm161 = vcmask 523264
    %v163 = vsel %vm161, %v100, 0
    %165 = vmatprep.subr.bf16.mxu0 %v146
    %166 = vmatpush1.bf16.msra.mxu0 %v145
    %167 = vmatprep.subr.bf16.mxu0 %v148
    %168 = vmatpush1.bf16.msra.mxu0 %v147
    %169 = vmatprep.subr.bf16.mxu0 %v150
    %170 = vmatpush1.bf16.msra.mxu0 %v149
    %171 = vmatprep.subr.bf16.mxu0 %v152
    %172 = vmatpush1.bf16.msra.mxu0 %v151
    %173 = vmatprep.subr.bf16.mxu0 0
    %174 = vmatpush1.bf16.msra.mxu0 0
    %175 = vmatprep.subr.bf16.mxu0 0
    %176 = vmatpush1.bf16.msra.mxu0 0
    %177 = vmatprep.subr.bf16.mxu0 0
    %178 = vmatpush1.bf16.msra.mxu0 0
    %179 = vmatprep.subr.bf16.mxu0 0
    %180 = vmatpush1.bf16.msra.mxu0 0
    %181 = vmatprep.subr.bf16.mxu0 0
    %182 = vmatpush1.bf16.msra.mxu0 0
    %183 = vmatprep.subr.bf16.mxu0 0
    %184 = vmatpush1.bf16.msra.mxu0 0
    %185 = vmatprep.subr.bf16.mxu0 0
    %186 = vmatpush1.bf16.msra.mxu0 0
    %187 = vmatprep.subr.bf16.mxu0 0
    %188 = vmatpush1.bf16.msra.mxu0 0
    %189 = vmatprep.subr.bf16.mxu0 0
    %190 = vmatpush1.bf16.msra.mxu0 0
    %191 = vmatprep.subr.bf16.mxu0 0
    %192 = vmatpush1.bf16.msra.mxu0 0
    %193 = vmatprep.subr.bf16.mxu0 0
    %194 = vmatpush1.bf16.msra.mxu0 0
    %195 = vmatprep.subr.bf16.mxu0 0
    %196 = vmatpush1.bf16.msra.mxu0 0
    %197 = vmatprep.mubr.bf16.mxu0 0
    %198 = vmatmul.mubr.bf16.gmra.mrb[0].mxu0 %v163
    %v199 = vpop.f32.mrb[0].mxu0
    %v200 = vadd.f32 %v114, %v199
    %v201 = vpop.f32.mrb[0].mxu0
    %v202 = vadd.f32 %v118, %v201
    %v203 = vpop.f32.mrb[0].mxu0
    %v204 = vadd.f32 %v114, %v203
    %v205 = vpop.f32.mrb[0].mxu0
    %v206 = vadd.f32 %v118, %v205
    %207 = vdwg.mxu0
    %v208 = vld [vmem:[#allocation7] sm:$0xff]
    %v209 = vld [vmem:[#allocation7 + $0x8] sm:$0xff]
    %v210 = vpack.c.bf16 %v204, %v200
    %v211 = vpack.c.bf16 %v206, %v202
    %213 = vrot.lane.b32.xlu0 %v210, 64
    %v214 = vpop.permute.xlu0 %213
    %vm215 = vcmask 130048
    %v217 = vsel %vm215, %v210, 0
    %v220 = vsel %vm215, %v214, 0
    %222 = vmatprep.subr.bf16.mxu0 0
    %223 = vmatpush1.bf16.xpose.msra.mxu0 %v220
    %224 = vmatprep.subr.bf16.mxu0 0
    %225 = vmatpush1.bf16.xpose.msra.mxu0 0
    %226 = vmatprep.subr.bf16.mxu0 0
    %227 = vmatpush1.bf16.xpose.msra.mxu0 0
    %228 = vmatprep.subr.bf16.mxu0 0
    %229 = vmatpush1.bf16.xpose.msra.mxu0 0
    %230 = vmatprep.subr.bf16.mxu0 0
    %231 = vmatpush1.bf16.xpose.msra.mxu0 0
    %232 = vmatprep.subr.bf16.mxu0 0
    %233 = vmatpush1.bf16.xpose.msra.mxu0 0
    %234 = vmatprep.subr.bf16.mxu0 0
    %235 = vmatpush1.bf16.xpose.msra.mxu0 0
    %236 = vmatprep.subr.bf16.mxu0 0
    %237 = vmatpush1.bf16.xpose.msra.mxu0 0
    %238 = vmatprep.subr.bf16.mxu0 0
    %239 = vmatpush1.bf16.xpose.msra.mxu0 0
    %240 = vmatprep.subr.bf16.mxu0 0
    %241 = vmatpush1.bf16.xpose.msra.mxu0 0
    %242 = vmatprep.subr.bf16.mxu0 0
    %243 = vmatpush1.bf16.xpose.msra.mxu0 0
    %244 = vmatprep.subr.bf16.mxu0 0
    %245 = vmatpush1.bf16.xpose.msra.mxu0 0
    %246 = vmatprep.subr.bf16.mxu0 0
    %247 = vmatpush1.bf16.xpose.msra.mxu0 0
    %248 = vmatprep.subr.bf16.mxu0 0
    %249 = vmatpush1.bf16.xpose.msra.mxu0 0
    %250 = vmatprep.subr.bf16.mxu0 0
    %251 = vmatpush1.bf16.xpose.msra.mxu0 0
    %252 = vmatprep.subr.bf16.mxu0 0
    %253 = vmatpush1.bf16.xpose.msra.mxu0 0
    %254 = vmatprep.mubr.bf16.mxu0 0
    %255 = vmatmul.mubr.bf16.gmra.mrb[0].mxu0 %v217
    %v256 = vpop.f32.mrb[0].mxu0
    %v257 = vadd.f32 %v208, %v256
    %v258 = vpop.f32.mrb[0].mxu0
    %v259 = vpop.f32.mrb[0].mxu0
    %v260 = vadd.f32 %v209, %v259
    %v261 = vpop.f32.mrb[0].mxu0
    %262 = vdwg.mxu0
    %v263 = vsel %vm215, %v257, -inf
    %264 = vmax.xlane.f32.xlu0 %v263
    %v265 = vpop.xlane.xlu0 %264
    %v266 = vsel %vm215, %v260, -inf
    %267 = vmax.xlane.f32.xlu0 %v266
    %v268 = vpop.xlane.xlu0 %267
    %v269 = vsub.f32 %v257, %v265
    %v270 = vsub.f32 %v260, %v268
    %v271 = vmul.f32 %v269, 1.442695
    %v272 = vpow.pop %v271
    %v273 = vmul.f32 %v270, 1.442695
    %v274 = vpow.pop %v273
    %v275 = vsel %vm215, %v272, 0.0
    %276 = vadd.xlane.f32.xlu0 %v275
    %v277 = vpop.xlane.xlu0 %276
    %v278 = vsel %vm215, %v274, 0.0
    %279 = vadd.xlane.f32.xlu0 %v278
    %v280 = vpop.xlane.xlu0 %279
    %v281 = vrcp.pop %v277
    %v282 = vmul.f32 %v272, %v281
    %v283 = vrcp.pop %v280
    %v284 = vmul.f32 %v274, %v283
    %v285 = vpack.c.bf16 %v284, %v282
    %v287 = vsel %vm215, %v285, 0
    %289 = vmatprep.subr.bf16.mxu0 0
    %290 = vmatpush1.bf16.msra.mxu0 %v211
    %291 = vmatprep.subr.bf16.mxu0 0
    %292 = vmatpush1.bf16.msra.mxu0 0
    %293 = vmatprep.subr.bf16.mxu0 0
    %294 = vmatpush1.bf16.msra.mxu0 0
    %295 = vmatprep.subr.bf16.mxu0 0
    %296 = vmatpush1.bf16.msra.mxu0 0
    %297 = vmatprep.subr.bf16.mxu0 0
    %298 = vmatpush1.bf16.msra.mxu0 0
    %299 = vmatprep.subr.bf16.mxu0 0
    %300 = vmatpush1.bf16.msra.mxu0 0
    %301 = vmatprep.subr.bf16.mxu0 0
    %302 = vmatpush1.bf16.msra.mxu0 0
    %303 = vmatprep.subr.bf16.mxu0 0
    %304 = vmatpush1.bf16.msra.mxu0 0
    %305 = vmatprep.subr.bf16.mxu0 0
    %306 = vmatpush1.bf16.msra.mxu0 0
    %307 = vmatprep.subr.bf16.mxu0 0
    %308 = vmatpush1.bf16.msra.mxu0 0
    %309 = vmatprep.subr.bf16.mxu0 0
    %310 = vmatpush1.bf16.msra.mxu0 0
    %311 = vmatprep.subr.bf16.mxu0 0
    %312 = vmatpush1.bf16.msra.mxu0 0
    %313 = vmatprep.subr.bf16.mxu0 0
    %314 = vmatpush1.bf16.msra.mxu0 0
    %315 = vmatprep.subr.bf16.mxu0 0
    %316 = vmatpush1.bf16.msra.mxu0 0
    %317 = vmatprep.subr.bf16.mxu0 0
    %318 = vmatpush1.bf16.msra.mxu0 0
    %319 = vmatprep.subr.bf16.mxu0 0
    %320 = vmatpush1.bf16.msra.mxu0 0
    %321 = vmatprep.mubr.bf16.mxu0 0
    %322 = vmatmul.mubr.bf16.gmra.mrb[0].mxu0 %v287
    %v323 = vpop.f32.mrb[0].mxu0
    %v324 = vadd.f32 0.0, %v323
    %v325 = vpop.f32.mrb[0].mxu0
    %v326 = vpop.f32.mrb[0].mxu0
    %v327 = vadd.f32 0.0, %v326
    %v328 = vpop.f32.mrb[0].mxu0
    %329 = vdwg.mxu0
    %330 = vrot.lane.b32.xlu0 %v210, 112
    %v331 = vpop.permute.xlu0 %330
    %332 = vrot.lane.b32.xlu0 %v210, 48
    %v333 = vpop.permute.xlu0 %332
    %v335 = vsel %vm215, %v331, 0
    %v338 = vsel %vm215, %v333, 0
    %340 = vmatprep.subr.bf16.mxu0 0
    %341 = vmatpush1.bf16.xpose.msra.mxu0 %v338
    %342 = vmatprep.subr.bf16.mxu0 0
    %343 = vmatpush1.bf16.xpose.msra.mxu0 0
    %344 = vmatprep.subr.bf16.mxu0 0
    %345 = vmatpush1.bf16.xpose.msra.mxu0 0
    %346 = vmatprep.subr.bf16.mxu0 0
    %347 = vmatpush1.bf16.xpose.msra.mxu0 0
    %348 = vmatprep.subr.bf16.mxu0 0
    %349 = vmatpush1.bf16.xpose.msra.mxu0 0
    %350 = vmatprep.subr.bf16.mxu0 0
    %351 = vmatpush1.bf16.xpose.msra.mxu0 0
    %352 = vmatprep.subr.bf16.mxu0 0
    %353 = vmatpush1.bf16.xpose.msra.mxu0 0
    %354 = vmatprep.subr.bf16.mxu0 0
    %355 = vmatpush1.bf16.xpose.msra.mxu0 0
    %356 = vmatprep.subr.bf16.mxu0 0
    %357 = vmatpush1.bf16.xpose.msra.mxu0 0
    %358 = vmatprep.subr.bf16.mxu0 0
    %359 = vmatpush1.bf16.xpose.msra.mxu0 0
    %360 = vmatprep.subr.bf16.mxu0 0
    %361 = vmatpush1.bf16.xpose.msra.mxu0 0
    %362 = vmatprep.subr.bf16.mxu0 0
    %363 = vmatpush1.bf16.xpose.msra.mxu0 0
    %364 = vmatprep.subr.bf16.mxu0 0
    %365 = vmatpush1.bf16.xpose.msra.mxu0 0
    %366 = vmatprep.subr.bf16.mxu0 0
    %367 = vmatpush1.bf16.xpose.msra.mxu0 0
    %368 = vmatprep.subr.bf16.mxu0 0
    %369 = vmatpush1.bf16.xpose.msra.mxu0 0
    %370 = vmatprep.subr.bf16.mxu0 0
    %371 = vmatpush1.bf16.xpose.msra.mxu0 0
    %372 = vmatprep.mubr.bf16.mxu0 0
    %373 = vmatmul.mubr.bf16.gmra.mrb[0].mxu0 %v335
    %v374 = vpop.f32.mrb[0].mxu0
    %v375 = vadd.f32 %v208, %v374
    %v376 = vpop.f32.mrb[0].mxu0
    %v377 = vpop.f32.mrb[0].mxu0
    %v378 = vadd.f32 %v209, %v377
    %v379 = vpop.f32.mrb[0].mxu0
    %380 = vdwg.mxu0
    %v381 = vsel %vm215, %v375, -inf
    %382 = vmax.xlane.f32.xlu0 %v381
    %v383 = vpop.xlane.xlu0 %382
    %v384 = vsel %vm215, %v378, -inf
    %385 = vmax.xlane.f32.xlu0 %v384
    %v386 = vpop.xlane.xlu0 %385
    %v387 = vsub.f32 %v375, %v383
    %v388 = vsub.f32 %v378, %v386
    %v389 = vmul.f32 %v387, 1.442695
    %v390 = vpow.pop %v389
    %v391 = vmul.f32 %v388, 1.442695
    %v392 = vpow.pop %v391
    %v393 = vsel %vm215, %v390, 0.0
    %394 = vadd.xlane.f32.xlu0 %v393
    %v395 = vpop.xlane.xlu0 %394
    %v396 = vsel %vm215, %v392, 0.0
    %397 = vadd.xlane.f32.xlu0 %v396
    %v398 = vpop.xlane.xlu0 %397
    %v399 = vrcp.pop %v395
    %v400 = vmul.f32 %v390, %v399
    %v401 = vrcp.pop %v398
    %v402 = vmul.f32 %v392, %v401
    %v403 = vpack.c.bf16 %v402, %v400
    %405 = vrot.lane.b32.xlu0 %v211, 112
    %v406 = vpop.permute.xlu0 %405
    %v409 = vsel %vm215, %v403, 0
    %411 = vmatprep.subr.bf16.mxu0 0
    %412 = vmatpush1.bf16.msra.mxu0 %v406
    %413 = vmatprep.subr.bf16.mxu0 0
    %414 = vmatpush1.bf16.msra.mxu0 0
    %415 = vmatprep.subr.bf16.mxu0 0
    %416 = vmatpush1.bf16.msra.mxu0 0
    %417 = vmatprep.subr.bf16.mxu0 0
    %418 = vmatpush1.bf16.msra.mxu0 0
    %419 = vmatprep.subr.bf16.mxu0 0
    %420 = vmatpush1.bf16.msra.mxu0 0
    %421 = vmatprep.subr.bf16.mxu0 0
    %422 = vmatpush1.bf16.msra.mxu0 0
    %423 = vmatprep.subr.bf16.mxu0 0
    %424 = vmatpush1.bf16.msra.mxu0 0
    %425 = vmatprep.subr.bf16.mxu0 0
    %426 = vmatpush1.bf16.msra.mxu0 0
    %427 = vmatprep.subr.bf16.mxu0 0
    %428 = vmatpush1.bf16.msra.mxu0 0
    %429 = vmatprep.subr.bf16.mxu0 0
    %430 = vmatpush1.bf16.msra.mxu0 0
    %431 = vmatprep.subr.bf16.mxu0 0
    %432 = vmatpush1.bf16.msra.mxu0 0
    %433 = vmatprep.subr.bf16.mxu0 0
    %434 = vmatpush1.bf16.msra.mxu0 0
    %435 = vmatprep.subr.bf16.mxu0 0
    %436 = vmatpush1.bf16.msra.mxu0 0
    %437 = vmatprep.subr.bf16.mxu0 0
    %438 = vmatpush1.bf16.msra.mxu0 0
    %439 = vmatprep.subr.bf16.mxu0 0
    %440 = vmatpush1.bf16.msra.mxu0 0
    %441 = vmatprep.subr.bf16.mxu0 0
    %442 = vmatpush1.bf16.msra.mxu0 0
    %443 = vmatprep.mubr.bf16.mxu0 0
    %444 = vmatmul.mubr.bf16.gmra.mrb[0].mxu0 %v409
    %v445 = vpop.f32.mrb[0].mxu0
    %v446 = vadd.f32 0.0, %v445
    %v447 = vpop.f32.mrb[0].mxu0
    %v448 = vpop.f32.mrb[0].mxu0
    %v449 = vadd.f32 0.0, %v448
    %v450 = vpop.f32.mrb[0].mxu0
    %451 = vdwg.mxu0
    %452 = vrot.lane.b32.xlu0 %v210, 96
    %v453 = vpop.permute.xlu0 %452
    %454 = vrot.lane.b32.xlu0 %v210, 32
    %v455 = vpop.permute.xlu0 %454
    %v457 = vsel %vm215, %v453, 0
    %v460 = vsel %vm215, %v455, 0
    %462 = vmatprep.subr.bf16.mxu0 0
    %463 = vmatpush1.bf16.xpose.msra.mxu0 %v460
    %464 = vmatprep.subr.bf16.mxu0 0
    %465 = vmatpush1.bf16.xpose.msra.mxu0 0
    %466 = vmatprep.subr.bf16.mxu0 0
    %467 = vmatpush1.bf16.xpose.msra.mxu0 0
    %468 = vmatprep.subr.bf16.mxu0 0
    %469 = vmatpush1.bf16.xpose.msra.mxu0 0
    %470 = vmatprep.subr.bf16.mxu0 0
    %471 = vmatpush1.bf16.xpose.msra.mxu0 0
    %472 = vmatprep.subr.bf16.mxu0 0
    %473 = vmatpush1.bf16.xpose.msra.mxu0 0
    %474 = vmatprep.subr.bf16.mxu0 0
    %475 = vmatpush1.bf16.xpose.msra.mxu0 0
    %476 = vmatprep.subr.bf16.mxu0 0
    %477 = vmatpush1.bf16.xpose.msra.mxu0 0
    %478 = vmatprep.subr.bf16.mxu0 0
    %479 = vmatpush1.bf16.xpose.msra.mxu0 0
    %480 = vmatprep.subr.bf16.mxu0 0
    %481 = vmatpush1.bf16.xpose.msra.mxu0 0
    %482 = vmatprep.subr.bf16.mxu0 0
    %483 = vmatpush1.bf16.xpose.msra.mxu0 0
    %484 = vmatprep.subr.bf16.mxu0 0
    %485 = vmatpush1.bf16.xpose.msra.mxu0 0
    %486 = vmatprep.subr.bf16.mxu0 0
    %487 = vmatpush1.bf16.xpose.msra.mxu0 0
    %488 = vmatprep.subr.bf16.mxu0 0
    %489 = vmatpush1.bf16.xpose.msra.mxu0 0
    %490 = vmatprep.subr.bf16.mxu0 0
    %491 = vmatpush1.bf16.xpose.msra.mxu0 0
    %492 = vmatprep.subr.bf16.mxu0 0
    %493 = vmatpush1.bf16.xpose.msra.mxu0 0
    %494 = vmatprep.mubr.bf16.mxu0 0
    %495 = vmatmul.mubr.bf16.gmra.mrb[0].mxu0 %v457
    %v496 = vpop.f32.mrb[0].mxu0
    %v497 = vadd.f32 %v208, %v496
    %v498 = vpop.f32.mrb[0].mxu0
    %v499 = vpop.f32.mrb[0].mxu0
    %v500 = vadd.f32 %v209, %v499
    %v501 = vpop.f32.mrb[0].mxu0
    %502 = vdwg.mxu0
    %v503 = vsel %vm215, %v497, -inf
    %504 = vmax.xlane.f32.xlu0 %v503
    %v505 = vpop.xlane.xlu0 %504
    %v506 = vsel %vm215, %v500, -inf
    %507 = vmax.xlane.f32.xlu0 %v506
    %v508 = vpop.xlane.xlu0 %507
    %v509 = vsub.f32 %v497, %v505
    %v510 = vsub.f32 %v500, %v508
    %v511 = vmul.f32 %v509, 1.442695
    %v512 = vpow.pop %v511
    %v513 = vmul.f32 %v510, 1.442695
    %v514 = vpow.pop %v513
    %v515 = vsel %vm215, %v512, 0.0
    %516 = vadd.xlane.f32.xlu0 %v515
    %v517 = vpop.xlane.xlu0 %516
    %v518 = vsel %vm215, %v514, 0.0
    %519 = vadd.xlane.f32.xlu0 %v518
    %v520 = vpop.xlane.xlu0 %519
    %v521 = vrcp.pop %v517
    %v522 = vmul.f32 %v512, %v521
    %v523 = vrcp.pop %v520
    %v524 = vmul.f32 %v514, %v523
    %v525 = vpack.c.bf16 %v524, %v522
    %526 = vrot.lane.b32.xlu0 %v211, 96
    %v527 = vpop.permute.xlu0 %526
    %v530 = vsel %vm215, %v525, 0
    %532 = vmatprep.subr.bf16.mxu0 0
    %533 = vmatpush1.bf16.msra.mxu0 %v527
    %534 = vmatprep.subr.bf16.mxu0 0
    %535 = vmatpush1.bf16.msra.mxu0 0
    %536 = vmatprep.subr.bf16.mxu0 0
    %537 = vmatpush1.bf16.msra.mxu0 0
    %538 = vmatprep.subr.bf16.mxu0 0
    %539 = vmatpush1.bf16.msra.mxu0 0
    %540 = vmatprep.subr.bf16.mxu0 0
    %541 = vmatpush1.bf16.msra.mxu0 0
    %542 = vmatprep.subr.bf16.mxu0 0
    %543 = vmatpush1.bf16.msra.mxu0 0
    %544 = vmatprep.subr.bf16.mxu0 0
    %545 = vmatpush1.bf16.msra.mxu0 0
    %546 = vmatprep.subr.bf16.mxu0 0
    %547 = vmatpush1.bf16.msra.mxu0 0
    %548 = vmatprep.subr.bf16.mxu0 0
    %549 = vmatpush1.bf16.msra.mxu0 0
    %550 = vmatprep.subr.bf16.mxu0 0
    %551 = vmatpush1.bf16.msra.mxu0 0
    %552 = vmatprep.subr.bf16.mxu0 0
    %553 = vmatpush1.bf16.msra.mxu0 0
    %554 = vmatprep.subr.bf16.mxu0 0
    %555 = vmatpush1.bf16.msra.mxu0 0
    %556 = vmatprep.subr.bf16.mxu0 0
    %557 = vmatpush1.bf16.msra.mxu0 0
    %558 = vmatprep.subr.bf16.mxu0 0
    %559 = vmatpush1.bf16.msra.mxu0 0
    %560 = vmatprep.subr.bf16.mxu0 0
    %561 = vmatpush1.bf16.msra.mxu0 0
    %562 = vmatprep.subr.bf16.mxu0 0
    %563 = vmatpush1.bf16.msra.mxu0 0
    %564 = vmatprep.mubr.bf16.mxu0 0
    %565 = vmatmul.mubr.bf16.gmra.mrb[0].mxu0 %v530
    %v566 = vpop.f32.mrb[0].mxu0
    %v567 = vadd.f32 0.0, %v566
    %v568 = vpop.f32.mrb[0].mxu0
    %v569 = vpop.f32.mrb[0].mxu0
    %v570 = vadd.f32 0.0, %v569
    %v571 = vpop.f32.mrb[0].mxu0
    %572 = vdwg.mxu0
    %573 = vrot.lane.b32.xlu0 %v210, 80
    %v574 = vpop.permute.xlu0 %573
    %575 = vrot.lane.b32.xlu0 %v210, 16
    %v576 = vpop.permute.xlu0 %575
    %v578 = vsel %vm215, %v574, 0
    %v581 = vsel %vm215, %v576, 0
    %583 = vmatprep.subr.bf16.mxu0 0
    %584 = vmatpush1.bf16.xpose.msra.mxu0 %v581
    %585 = vmatprep.subr.bf16.mxu0 0
    %586 = vmatpush1.bf16.xpose.msra.mxu0 0
    %587 = vmatprep.subr.bf16.mxu0 0
    %588 = vmatpush1.bf16.xpose.msra.mxu0 0
    %589 = vmatprep.subr.bf16.mxu0 0
    %590 = vmatpush1.bf16.xpose.msra.mxu0 0
    %591 = vmatprep.subr.bf16.mxu0 0
    %592 = vmatpush1.bf16.xpose.msra.mxu0 0
    %593 = vmatprep.subr.bf16.mxu0 0
    %594 = vmatpush1.bf16.xpose.msra.mxu0 0
    %595 = vmatprep.subr.bf16.mxu0 0
    %596 = vmatpush1.bf16.xpose.msra.mxu0 0
    %597 = vmatprep.subr.bf16.mxu0 0
    %598 = vmatpush1.bf16.xpose.msra.mxu0 0
    %599 = vmatprep.subr.bf16.mxu0 0
    %600 = vmatpush1.bf16.xpose.msra.mxu0 0
    %601 = vmatprep.subr.bf16.mxu0 0
    %602 = vmatpush1.bf16.xpose.msra.mxu0 0
    %603 = vmatprep.subr.bf16.mxu0 0
    %604 = vmatpush1.bf16.xpose.msra.mxu0 0
    %605 = vmatprep.subr.bf16.mxu0 0
    %606 = vmatpush1.bf16.xpose.msra.mxu0 0
    %607 = vmatprep.subr.bf16.mxu0 0
    %608 = vmatpush1.bf16.xpose.msra.mxu0 0
    %609 = vmatprep.subr.bf16.mxu0 0
    %610 = vmatpush1.bf16.xpose.msra.mxu0 0
    %611 = vmatprep.subr.bf16.mxu0 0
    %612 = vmatpush1.bf16.xpose.msra.mxu0 0
    %613 = vmatprep.subr.bf16.mxu0 0
    %614 = vmatpush1.bf16.xpose.msra.mxu0 0
    %615 = vmatprep.mubr.bf16.mxu0 0
    %616 = vmatmul.mubr.bf16.gmra.mrb[0].mxu0 %v578
    %v617 = vpop.f32.mrb[0].mxu0
    %v618 = vadd.f32 %v208, %v617
    %v619 = vpop.f32.mrb[0].mxu0
    %v620 = vpop.f32.mrb[0].mxu0
    %v621 = vadd.f32 %v209, %v620
    %v622 = vpop.f32.mrb[0].mxu0
    %623 = vdwg.mxu0
    %v624 = vsel %vm215, %v618, -inf
    %625 = vmax.xlane.f32.xlu0 %v624
    %v626 = vpop.xlane.xlu0 %625
    %v627 = vsel %vm215, %v621, -inf
    %628 = vmax.xlane.f32.xlu0 %v627
    %v629 = vpop.xlane.xlu0 %628
    %v630 = vsub.f32 %v618, %v626
    %v631 = vsub.f32 %v621, %v629
    %v632 = vmul.f32 %v630, 1.442695
    %v633 = vpow.pop %v632
    %v634 = vmul.f32 %v631, 1.442695
    %v635 = vpow.pop %v634
    %v636 = vsel %vm215, %v633, 0.0
    %637 = vadd.xlane.f32.xlu0 %v636
    %v638 = vpop.xlane.xlu0 %637
    %v639 = vsel %vm215, %v635, 0.0
    %640 = vadd.xlane.f32.xlu0 %v639
    %v641 = vpop.xlane.xlu0 %640
    %v642 = vrcp.pop %v638
    %v643 = vmul.f32 %v633, %v642
    %v644 = vrcp.pop %v641
    %v645 = vmul.f32 %v635, %v644
    %v646 = vpack.c.bf16 %v645, %v643
    %647 = vrot.lane.b32.xlu0 %v211, 80
    %v648 = vpop.permute.xlu0 %647
    %v651 = vsel %vm215, %v646, 0
    %653 = vmatprep.subr.bf16.mxu0 0
    %654 = vmatpush1.bf16.msra.mxu0 %v648
    %655 = vmatprep.subr.bf16.mxu0 0
    %656 = vmatpush1.bf16.msra.mxu0 0
    %657 = vmatprep.subr.bf16.mxu0 0
    %658 = vmatpush1.bf16.msra.mxu0 0
    %659 = vmatprep.subr.bf16.mxu0 0
    %660 = vmatpush1.bf16.msra.mxu0 0
    %661 = vmatprep.subr.bf16.mxu0 0
    %662 = vmatpush1.bf16.msra.mxu0 0
    %663 = vmatprep.subr.bf16.mxu0 0
    %664 = vmatpush1.bf16.msra.mxu0 0
    %665 = vmatprep.subr.bf16.mxu0 0
    %666 = vmatpush1.bf16.msra.mxu0 0
    %667 = vmatprep.subr.bf16.mxu0 0
    %668 = vmatpush1.bf16.msra.mxu0 0
    %669 = vmatprep.subr.bf16.mxu0 0
    %670 = vmatpush1.bf16.msra.mxu0 0
    %671 = vmatprep.subr.bf16.mxu0 0
    %672 = vmatpush1.bf16.msra.mxu0 0
    %673 = vmatprep.subr.bf16.mxu0 0
    %674 = vmatpush1.bf16.msra.mxu0 0
    %675 = vmatprep.subr.bf16.mxu0 0
    %676 = vmatpush1.bf16.msra.mxu0 0
    %677 = vmatprep.subr.bf16.mxu0 0
    %678 = vmatpush1.bf16.msra.mxu0 0
    %679 = vmatprep.subr.bf16.mxu0 0
    %680 = vmatpush1.bf16.msra.mxu0 0
    %681 = vmatprep.subr.bf16.mxu0 0
    %682 = vmatpush1.bf16.msra.mxu0 0
    %683 = vmatprep.subr.bf16.mxu0 0
    %684 = vmatpush1.bf16.msra.mxu0 0
    %685 = vmatprep.mubr.bf16.mxu0 0
    %686 = vmatmul.mubr.bf16.gmra.mrb[0].mxu0 %v651
    %v687 = vpop.f32.mrb[0].mxu0
    %v688 = vadd.f32 0.0, %v687
    %v689 = vpop.f32.mrb[0].mxu0
    %v690 = vpop.f32.mrb[0].mxu0
    %v691 = vadd.f32 0.0, %v690
    %v692 = vpop.f32.mrb[0].mxu0
    %693 = vdwg.mxu0
    %696 = vrot.lane.b32.xlu0 %v446, 16
    %v697 = vpop.permute.xlu0 %696
    %698 = vrot.lane.b32.xlu0 %v449, 16
    %v699 = vpop.permute.xlu0 %698
    %704 = vrot.lane.b32.xlu0 %v567, 32
    %v705 = vpop.permute.xlu0 %704
    %706 = vrot.lane.b32.xlu0 %v570, 32
    %v707 = vpop.permute.xlu0 %706
    %712 = vrot.lane.b32.xlu0 %v688, 48
    %v713 = vpop.permute.xlu0 %712
    %714 = vrot.lane.b32.xlu0 %v691, 48
    %v715 = vpop.permute.xlu0 %714
    %v718 = vsel %vm215, %v324, %v697
    %v719 = vsel %vm215, %v327, %v699
    %vm720 = vcmask 261120
    %v721 = vsel %vm720, %v718, %v705
    %v722 = vsel %vm720, %v719, %v707
    %vm723 = vcmask 392192
    %v724 = vsel %vm723, %v721, %v713
    %v725 = vsel %vm723, %v722, %v715
    %v726 = vpack.c.bf16 %v725, %v724
    %v727 = vld [vmem:[#allocation10 + $0x4] sm:$0xf]
    %v728 = vld [vmem:[#allocation10 + $0x1c] sm:$0xf]
    %v729 = vld [vmem:[#allocation10 + $0x34] sm:$0xf]
    %v730 = vld [vmem:[#allocation10 + $0x4c] sm:$0xf]
    %v731 = vld [vmem:[#allocation10 + $0x64] sm:$0xf]
    %v732 = vld [vmem:[#allocation10 + $0x7c] sm:$0xf]
    %v733 = vld [vmem:[#allocation10 + $0x94] sm:$0xf]
    %v734 = vld [vmem:[#allocation10 + $0xac] sm:$0xf]
    %v735 = vld [vmem:[%s6 + $0x1] ss:$0 sm:$0xff]
    %v744 = vunpack.c.l.b16 %v727
    %v745 = vunpack.c.l.b16 %v728
    %v746 = vunpack.c.l.b16 %v729
    %v747 = vunpack.c.l.b16 %v730
    %v748 = vunpack.c.l.b16 %v731
    %v749 = vunpack.c.l.b16 %v732
    %v750 = vunpack.c.l.b16 %v733
    %v751 = vunpack.c.l.b16 %v734
    %v752 = vpack.c.b16 %v745, %v744
    %v753 = vpack.c.b16 %v747, %v746
    %v754 = vpack.c.b16 %v749, %v748
    %v755 = vpack.c.b16 %v751, %v750
    %756 = vrot.lane.b32.xlu0 %v752, 64
    %v757 = vpop.permute.xlu0 %756
    %758 = vrot.lane.b32.xlu0 %v753, 64
    %v759 = vpop.permute.xlu0 %758
    %760 = vrot.lane.b32.xlu0 %v754, 64
    %v761 = vpop.permute.xlu0 %760
    %762 = vrot.lane.b32.xlu0 %v755, 64
    %v763 = vpop.permute.xlu0 %762
    %v769 = vsel %vm161, %v726, 0
    %771 = vmatprep.subr.bf16.mxu0 0
    %772 = vmatpush1.bf16.msra.mxu0 %v757
    %773 = vmatprep.subr.bf16.mxu0 0
    %774 = vmatpush1.bf16.msra.mxu0 %v759
    %775 = vmatprep.subr.bf16.mxu0 0
    %776 = vmatpush1.bf16.msra.mxu0 %v761
    %777 = vmatprep.subr.bf16.mxu0 0
    %778 = vmatpush1.bf16.msra.mxu0 %v763
    %779 = vmatprep.subr.bf16.mxu0 0
    %780 = vmatpush1.bf16.msra.mxu0 0
    %781 = vmatprep.subr.bf16.mxu0 0
    %782 = vmatpush1.bf16.msra.mxu0 0
    %783 = vmatprep.subr.bf16.mxu0 0
    %784 = vmatpush1.bf16.msra.mxu0 0
    %785 = vmatprep.subr.bf16.mxu0 0
    %786 = vmatpush1.bf16.msra.mxu0 0
    %787 = vmatprep.subr.bf16.mxu0 0
    %788 = vmatpush1.bf16.msra.mxu0 0
    %789 = vmatprep.subr.bf16.mxu0 0
    %790 = vmatpush1.bf16.msra.mxu0 0
    %791 = vmatprep.subr.bf16.mxu0 0
    %792 = vmatpush1.bf16.msra.mxu0 0
    %793 = vmatprep.subr.bf16.mxu0 0
    %794 = vmatpush1.bf16.msra.mxu0 0
    %795 = vmatprep.subr.bf16.mxu0 0
    %796 = vmatpush1.bf16.msra.mxu0 0
    %797 = vmatprep.subr.bf16.mxu0 0
    %798 = vmatpush1.bf16.msra.mxu0 0
    %799 = vmatprep.subr.bf16.mxu0 0
    %800 = vmatpush1.bf16.msra.mxu0 0
    %801 = vmatprep.subr.bf16.mxu0 0
    %802 = vmatpush1.bf16.msra.mxu0 0
    %803 = vmatprep.mubr.bf16.mxu0 0
    %804 = vmatmul.mubr.bf16.gmra.mrb[0].mxu0 %v769
    %v805 = vpop.f32.mrb[0].mxu0
    %v806 = vadd.f32 %v735, %v805
    %v807 = vpop.f32.mrb[0].mxu0
    %v808 = vpop.f32.mrb[0].mxu0
    %v809 = vadd.f32 %v735, %v808
    %v810 = vpop.f32.mrb[0].mxu0
    %811 = vdwg.mxu0
    %v812 = vadd.f32 %v96, %v806
    %v813 = vadd.f32 %v97, %v809
    %v814 = vld [vmem:[%s6 + $0x7] ss:$0 sm:$0xff]
    %v815 = vld [vmem:[%s6 + $0x10] ss:$0 sm:$0xff]
    %v816 = vsel %vm161, %v812, 0.0
    %817 = vadd.xlane.f32.xlu0 %v816
    %v818 = vpop.xlane.xlu0 %817
    %v819 = vsel %vm161, %v813, 0.0
    %820 = vadd.xlane.f32.xlu0 %v819
    %v821 = vpop.xlane.xlu0 %820
    %v822 = vrcp.pop 64.0
    %v823 = vmul.f32 %v818, %v822
    %v824 = vmul.f32 %v821, %v822
    %v825 = vsub.f32 %v812, %v823
    %v826 = vsub.f32 %v813, %v824
    %v827 = vmul.f32 %v825, %v825
    %v828 = vmul.f32 %v826, %v826
    %v829 = vsel %vm161, %v827, 0.0
    %830 = vadd.xlane.f32.xlu0 %v829
    %v831 = vpop.xlane.xlu0 %830
    %v832 = vsel %vm161, %v828, 0.0
    %833 = vadd.xlane.f32.xlu0 %v832
    %v834 = vpop.xlane.xlu0 %833
    %v835 = vmul.f32 %v831, %v822
    %v836 = vmul.f32 %v834, %v822
    %v837 = vadd.f32 %v835, 1e-05
    %v838 = vadd.f32 %v836, 1e-05
    %v839 = vrsqrt.pop %v837
    %v840 = vrsqrt.pop %v838
    %v841 = vmul.f32 %v825, %v839
    %v842 = vmul.f32 %v826, %v840
    %v843 = vmul.f32 %v841, %v814
    %v844 = vmul.f32 %v842, %v814
    %v845 = vadd.f32 %v843, %v815
    %v846 = vadd.f32 %v844, %v815
    %848 = vset.pattern.permute.xlu0 0
    %849 = vperm.xlu0 %848, %v98
    %v850 = vpop.permute.xlu0 %849
    %853 = vset.pattern.permute.xlu0 0
    %854 = vperm.xlu0 %853, %v99
    %v855 = vpop.permute.xlu0 %854
    %v857 = vmul.f32 %v845, %v850
    %v858 = vmul.f32 %v846, %v855
    %v859 = vpack.c.bf16 %v858, %v857
    %v860 = vld [vmem:[#allocation10 + $0x8] sm:$0xf]
    %v861 = vld [vmem:[#allocation10 + $0x20] sm:$0xf]
    %v862 = vld [vmem:[#allocation10 + $0x38] sm:$0xf]
    %v863 = vld [vmem:[#allocation10 + $0x50] sm:$0xf]
    %v864 = vld [vmem:[#allocation10 + $0x68] sm:$0xf]
    %v865 = vld [vmem:[#allocation10 + $0x80] sm:$0xf]
    %v866 = vld [vmem:[#allocation10 + $0x98] sm:$0xf]
    %v867 = vld [vmem:[#allocation10 + $0xb0] sm:$0xf]
    %v868 = vld [vmem:[%s6 + $0x2] ss:$0 sm:$0xff]
    %v877 = vunpack.c.l.b16 %v860
    %v878 = vunpack.c.l.b16 %v861
    %v879 = vunpack.c.l.b16 %v862
    %v880 = vunpack.c.l.b16 %v863
    %v881 = vunpack.c.l.b16 %v864
    %v882 = vunpack.c.l.b16 %v865
    %v883 = vunpack.c.l.b16 %v866
    %v884 = vunpack.c.l.b16 %v867
    %v885 = vpack.c.b16 %v878, %v877
    %v886 = vpack.c.b16 %v880, %v879
    %v887 = vpack.c.b16 %v882, %v881
    %v888 = vpack.c.b16 %v884, %v883
    %v894 = vsel %vm161, %v859, 0
    %896 = vmatprep.subr.bf16.mxu0 0
    %897 = vmatpush1.bf16.msra.mxu0 %v885
    %898 = vmatprep.subr.bf16.mxu0 0
    %899 = vmatpush1.bf16.msra.mxu0 %v886
    %900 = vmatprep.subr.bf16.mxu0 0
    %901 = vmatpush1.bf16.msra.mxu0 %v887
    %902 = vmatprep.subr.bf16.mxu0 0
    %903 = vmatpush1.bf16.msra.mxu0 %v888
    %904 = vmatprep.subr.bf16.mxu0 0
    %905 = vmatpush1.bf16.msra.mxu0 0
    %906 = vmatprep.subr.bf16.mxu0 0
    %907 = vmatpush1.bf16.msra.mxu0 0
    %908 = vmatprep.subr.bf16.mxu0 0
    %909 = vmatpush1.bf16.msra.mxu0 0
    %910 = vmatprep.subr.bf16.mxu0 0
    %911 = vmatpush1.bf16.msra.mxu0 0
    %912 = vmatprep.subr.bf16.mxu0 0
    %913 = vmatpush1.bf16.msra.mxu0 0
    %914 = vmatprep.subr.bf16.mxu0 0
    %915 = vmatpush1.bf16.msra.mxu0 0
    %916 = vmatprep.subr.bf16.mxu0 0
    %917 = vmatpush1.bf16.msra.mxu0 0
    %918 = vmatprep.subr.bf16.mxu0 0
    %919 = vmatpush1.bf16.msra.mxu0 0
    %920 = vmatprep.subr.bf16.mxu0 0
    %921 = vmatpush1.bf16.msra.mxu0 0
    %922 = vmatprep.subr.bf16.mxu0 0
    %923 = vmatpush1.bf16.msra.mxu0 0
    %924 = vmatprep.subr.bf16.mxu0 0
    %925 = vmatpush1.bf16.msra.mxu0 0
    %926 = vmatprep.subr.bf16.mxu0 0
    %927 = vmatpush1.bf16.msra.mxu0 0
    %928 = vmatprep.mubr.bf16.mxu0 0
    %929 = vmatmul.mubr.bf16.gmra.mrb[0].mxu0 %v894
    %v930 = vpop.f32.mrb[0].mxu0
    %v931 = vadd.f32 %v868, %v930
    %v932 = vpop.f32.mrb[0].mxu0
    %v933 = vpop.f32.mrb[0].mxu0
    %v934 = vadd.f32 %v868, %v933
    %v935 = vpop.f32.mrb[0].mxu0
    %936 = vdwg.mxu0
    %v937 = vld [vmem:[#allocation5] sm:$0xff]
    %v938 = vld [vmem:[#allocation5 + $0x8] sm:$0xff]
    %v939 = vld [vmem:[#allocation5 + $0x10] sm:$0xff]
    %v940 = vld [vmem:[#allocation5 + $0x18] sm:$0xff]
    %v941 = vpack.c.bf16 %v938, %v937
    %v942 = vpack.c.bf16 %v940, %v939
    %v943 = vld [vmem:[#allocation10 + $0x8] sm:$0xff]
    %v944 = vld [vmem:[#allocation10 + $0x20] sm:$0xff]
    %v945 = vld [vmem:[#allocation10 + $0x38] sm:$0xff]
    %v946 = vld [vmem:[#allocation10 + $0x50] sm:$0xff]
    %v947 = vld [vmem:[#allocation10 + $0x68] sm:$0xff]
    %v948 = vld [vmem:[#allocation10 + $0x80] sm:$0xff]
    %v949 = vld [vmem:[#allocation10 + $0x98] sm:$0xff]
    %v950 = vld [vmem:[#allocation10 + $0xb0] sm:$0xff]
    %v951 = vld [vmem:[%s6 + $0x3] ss:$0 sm:$0xff]
    %v960 = vunpack.c.l.b16 %v943
    %v961 = vunpack.c.h.b16 %v943
    %v962 = vunpack.c.l.b16 %v944
    %v963 = vunpack.c.h.b16 %v944
    %v964 = vunpack.c.l.b16 %v945
    %v965 = vunpack.c.h.b16 %v945
    %v966 = vunpack.c.l.b16 %v946
    %v967 = vunpack.c.h.b16 %v946
    %v968 = vunpack.c.l.b16 %v947
    %v969 = vunpack.c.h.b16 %v947
    %v970 = vunpack.c.l.b16 %v948
    %v971 = vunpack.c.h.b16 %v948
    %v972 = vunpack.c.l.b16 %v949
    %v973 = vunpack.c.h.b16 %v949
    %v974 = vunpack.c.l.b16 %v950
    %v975 = vunpack.c.h.b16 %v950
    %v976 = vpack.c.b16 %v962, %v960
    %v977 = vpack.c.b16 %v963, %v961
    %v978 = vpack.c.b16 %v966, %v964
    %v979 = vpack.c.b16 %v967, %v965
    %v980 = vpack.c.b16 %v970, %v968
    %v981 = vpack.c.b16 %v971, %v969
    %v982 = vpack.c.b16 %v974, %v972
    %v983 = vpack.c.b16 %v975, %v973
    %984 = vrot.lane.b32.xlu0 %v976, 64
    %v985 = vpop.permute.xlu0 %984
    %986 = vrot.lane.b32.xlu0 %v977, 64
    %v987 = vpop.permute.xlu0 %986
    %988 = vrot.lane.b32.xlu0 %v978, 64
    %v989 = vpop.permute.xlu0 %988
    %990 = vrot.lane.b32.xlu0 %v979, 64
    %v991 = vpop.permute.xlu0 %990
    %992 = vrot.lane.b32.xlu0 %v980, 64
    %v993 = vpop.permute.xlu0 %992
    %994 = vrot.lane.b32.xlu0 %v981, 64
    %v995 = vpop.permute.xlu0 %994
    %996 = vrot.lane.b32.xlu0 %v982, 64
    %v997 = vpop.permute.xlu0 %996
    %998 = vrot.lane.b32.xlu0 %v983, 64
    %v999 = vpop.permute.xlu0 %998
    %vm1000 = vcmask 523264
    %v1001 = vsel %vm1000, %v985, %v987
    %v1002 = vsel %vm1000, %v989, %v991
    %v1003 = vsel %vm1000, %v993, %v995
    %v1004 = vsel %vm1000, %v997, %v999
    %v1010 = vsel %vm161, %v941, 0
    %v1013 = vsel %vm161, %v942, 0
    %1015 = vmatprep.subr.bf16.mxu0 0
    %1016 = vmatpush1.bf16.msra.mxu0 %v1001
    %1017 = vmatprep.subr.bf16.mxu0 0
    %1018 = vmatpush1.bf16.msra.mxu0 %v1002
    %1019 = vmatprep.subr.bf16.mxu0 0
    %1020 = vmatpush1.bf16.msra.mxu0 %v1003
    %1021 = vmatprep.subr.bf16.mxu0 0
    %1022 = vmatpush1.bf16.msra.mxu0 %v1004
    %1023 = vmatprep.subr.bf16.mxu0 0
    %1024 = vmatpush1.bf16.msra.mxu0 0
    %1025 = vmatprep.subr.bf16.mxu0 0
    %1026 = vmatpush1.bf16.msra.mxu0 0
    %1027 = vmatprep.subr.bf16.mxu0 0
    %1028 = vmatpush1.bf16.msra.mxu0 0
    %1029 = vmatprep.subr.bf16.mxu0 0
    %1030 = vmatpush1.bf16.msra.mxu0 0
    %1031 = vmatprep.subr.bf16.mxu0 0
    %1032 = vmatpush1.bf16.msra.mxu0 0
    %1033 = vmatprep.subr.bf16.mxu0 0
    %1034 = vmatpush1.bf16.msra.mxu0 0
    %1035 = vmatprep.subr.bf16.mxu0 0
    %1036 = vmatpush1.bf16.msra.mxu0 0
    %1037 = vmatprep.subr.bf16.mxu0 0
    %1038 = vmatpush1.bf16.msra.mxu0 0
    %1039 = vmatprep.subr.bf16.mxu0 0
    %1040 = vmatpush1.bf16.msra.mxu0 0
    %1041 = vmatprep.subr.bf16.mxu0 0
    %1042 = vmatpush1.bf16.msra.mxu0 0
    %1043 = vmatprep.subr.bf16.mxu0 0
    %1044 = vmatpush1.bf16.msra.mxu0 0
    %1045 = vmatprep.subr.bf16.mxu0 0
    %1046 = vmatpush1.bf16.msra.mxu0 0
    %1047 = vmatprep.mubr.bf16.mxu0 0
    %1048 = vmatmul.mubr.bf16.gmra.mrb[0].mxu0 %v1010
    %v1049 = vpop.f32.mrb[0].mxu0
    %v1050 = vadd.f32 %v951, %v1049
    %v1051 = vpop.f32.mrb[0].mxu0
    %v1052 = vpop.f32.mrb[0].mxu0
    %v1053 = vadd.f32 %v951, %v1052
    %v1054 = vpop.f32.mrb[0].mxu0
    %1055 = vmatprep.mubr.bf16.mxu0 0
    %1056 = vmatmul.mubr.bf16.gmra.mrb[0].mxu0 %v1013
    %v1057 = vpop.f32.mrb[0].mxu0
    %v1058 = vadd.f32 %v951, %v1057
    %v1059 = vpop.f32.mrb[0].mxu0
    %v1060 = vpop.f32.mrb[0].mxu0
    %v1061 = vadd.f32 %v951, %v1060
    %v1062 = vpop.f32.mrb[0].mxu0
    %1063 = vdwg.mxu0
    %v1064 = vld [vmem:[#allocation8] sm:$0xff]
    %v1065 = vld [vmem:[#allocation8 + $0x8] sm:$0xff]
    %v1066 = vpack.c.bf16 %v934, %v931
    %v1067 = vpack.c.bf16 %v1053, %v1050
    %v1068 = vpack.c.bf16 %v1061, %v1058
    %v1070 = vsel %vm215, %v1066, 0
    %v1073 = vsel %vm215, %v1067, 0
    %v1076 = vsel %vm215, %v1068, 0
    %1078 = vmatprep.subr.bf16.mxu0 0
    %1079 = vmatpush1.bf16.xpose.msra.mxu0 %v1073
    %1080 = vmatprep.subr.bf16.mxu0 0
    %1081 = vmatpush1.bf16.xpose.msra.mxu0 %v1076
    %1082 = vmatprep.subr.bf16.mxu0 0
    %1083 = vmatpush1.bf16.xpose.msra.mxu0 0
    %1084 = vmatprep.subr.bf16.mxu0 0
    %1085 = vmatpush1.bf16.xpose.msra.mxu0 0
    %1086 = vmatprep.subr.bf16.mxu0 0
    %1087 = vmatpush1.bf16.xpose.msra.mxu0 0
    %1088 = vmatprep.subr.bf16.mxu0 0
    %1089 = vmatpush1.bf16.xpose.msra.mxu0 0
    %1090 = vmatprep.subr.bf16.mxu0 0
    %1091 = vmatpush1.bf16.xpose.msra.mxu0 0
    %1092 = vmatprep.subr.bf16.mxu0 0
    %1093 = vmatpush1.bf16.xpose.msra.mxu0 0
    %1094 = vmatprep.subr.bf16.mxu0 0
    %1095 = vmatpush1.bf16.xpose.msra.mxu0 0
    %1096 = vmatprep.subr.bf16.mxu0 0
    %1097 = vmatpush1.bf16.xpose.msra.mxu0 0
    %1098 = vmatprep.subr.bf16.mxu0 0
    %1099 = vmatpush1.bf16.xpose.msra.mxu0 0
    %1100 = vmatprep.subr.bf16.mxu0 0
    %1101 = vmatpush1.bf16.xpose.msra.mxu0 0
    %1102 = vmatprep.subr.bf16.mxu0 0
    %1103 = vmatpush1.bf16.xpose.msra.mxu0 0
    %1104 = vmatprep.subr.bf16.mxu0 0
    %1105 = vmatpush1.bf16.xpose.msra.mxu0 0
    %1106 = vmatprep.subr.bf16.mxu0 0
    %1107 = vmatpush1.bf16.xpose.msra.mxu0 0
    %1108 = vmatprep.subr.bf16.mxu0 0
    %1109 = vmatpush1.bf16.xpose.msra.mxu0 0
    %1110 = vmatprep.mubr.bf16.mxu0 0
    %1111 = vmatmul.mubr.bf16.gmra.mrb[0].mxu0 %v1070
    %v1112 = vpop.f32.mrb[0].mxu0
    %v1113 = vadd.f32 %v1064, %v1112
    %v1114 = vpop.f32.mrb[0].mxu0
    %v1115 = vpop.f32.mrb[0].mxu0
    %v1116 = vadd.f32 %v1065, %v1115
    %v1117 = vpop.f32.mrb[0].mxu0
    %1118 = vdwg.mxu0
    %v1119 = vsel %vm720, %v1113, -inf
    %1120 = vmax.xlane.f32.xlu0 %v1119
    %v1121 = vpop.xlane.xlu0 %1120
    %v1122 = vsel %vm720, %v1116, -inf
    %1123 = vmax.xlane.f32.xlu0 %v1122
    %v1124 = vpop.xlane.xlu0 %1123
    %v1125 = vsub.f32 %v1113, %v1121
    %v1126 = vsub.f32 %v1116, %v1124
    %v1127 = vmul.f32 %v1125, 1.442695
    %v1128 = vpow.pop %v1127
    %v1129 = vmul.f32 %v1126, 1.442695
    %v1130 = vpow.pop %v1129
    %v1131 = vsel %vm720, %v1128, 0.0
    %1132 = vadd.xlane.f32.xlu0 %v1131
    %v1133 = vpop.xlane.xlu0 %1132
    %v1134 = vsel %vm720, %v1130, 0.0
    %1135 = vadd.xlane.f32.xlu0 %v1134
    %v1136 = vpop.xlane.xlu0 %1135
    %v1137 = vrcp.pop %v1133
    %v1138 = vmul.f32 %v1128, %v1137
    %v1139 = vrcp.pop %v1136
    %v1140 = vmul.f32 %v1130, %v1139
    %v1141 = vpack.c.bf16 %v1140, %v1138
    %1144 = vrot.lane.b32.xlu0 %v1067, 64
    %v1145 = vpop.permute.xlu0 %1144
    %1146 = vrot.lane.b32.xlu0 %v1068, 64
    %v1147 = vpop.permute.xlu0 %1146
    %v1151 = vsel %vm720, %v1141, 0
    %1153 = vmatprep.subr.bf16.mxu0 0
    %1154 = vmatpush1.bf16.msra.mxu0 %v1145
    %1155 = vmatprep.subr.bf16.mxu0 0
    %1156 = vmatpush1.bf16.msra.mxu0 %v1147
    %1157 = vmatprep.subr.bf16.mxu0 0
    %1158 = vmatpush1.bf16.msra.mxu0 0
    %1159 = vmatprep.subr.bf16.mxu0 0
    %1160 = vmatpush1.bf16.msra.mxu0 0
    %1161 = vmatprep.subr.bf16.mxu0 0
    %1162 = vmatpush1.bf16.msra.mxu0 0
    %1163 = vmatprep.subr.bf16.mxu0 0
    %1164 = vmatpush1.bf16.msra.mxu0 0
    %1165 = vmatprep.subr.bf16.mxu0 0
    %1166 = vmatpush1.bf16.msra.mxu0 0
    %1167 = vmatprep.subr.bf16.mxu0 0
    %1168 = vmatpush1.bf16.msra.mxu0 0
    %1169 = vmatprep.subr.bf16.mxu0 0
    %1170 = vmatpush1.bf16.msra.mxu0 0
    %1171 = vmatprep.subr.bf16.mxu0 0
    %1172 = vmatpush1.bf16.msra.mxu0 0
    %1173 = vmatprep.subr.bf16.mxu0 0
    %1174 = vmatpush1.bf16.msra.mxu0 0
    %1175 = vmatprep.subr.bf16.mxu0 0
    %1176 = vmatpush1.bf16.msra.mxu0 0
    %1177 = vmatprep.subr.bf16.mxu0 0
    %1178 = vmatpush1.bf16.msra.mxu0 0
    %1179 = vmatprep.subr.bf16.mxu0 0
    %1180 = vmatpush1.bf16.msra.mxu0 0
    %1181 = vmatprep.subr.bf16.mxu0 0
    %1182 = vmatpush1.bf16.msra.mxu0 0
    %1183 = vmatprep.subr.bf16.mxu0 0
    %1184 = vmatpush1.bf16.msra.mxu0 0
    %1185 = vmatprep.mubr.bf16.mxu0 0
    %1186 = vmatmul.mubr.bf16.gmra.mrb[0].mxu0 %v1151
    %v1187 = vpop.f32.mrb[0].mxu0
    %v1188 = vadd.f32 0.0, %v1187
    %v1189 = vpop.f32.mrb[0].mxu0
    %v1190 = vpop.f32.mrb[0].mxu0
    %v1191 = vadd.f32 0.0, %v1190
    %v1192 = vpop.f32.mrb[0].mxu0
    %1193 = vdwg.mxu0
    %1195 = vrot.lane.b32.xlu0 %v1066, 112
    %v1196 = vpop.permute.xlu0 %1195
    %1197 = vrot.lane.b32.xlu0 %v1067, 112
    %v1198 = vpop.permute.xlu0 %1197
    %1199 = vrot.lane.b32.xlu0 %v1068, 112
    %v1200 = vpop.permute.xlu0 %1199
    %v1202 = vsel %vm215, %v1196, 0
    %v1205 = vsel %vm215, %v1198, 0
    %v1208 = vsel %vm215, %v1200, 0
    %1210 = vmatprep.subr.bf16.mxu0 0
    %1211 = vmatpush1.bf16.xpose.msra.mxu0 %v1205
    %1212 = vmatprep.subr.bf16.mxu0 0
    %1213 = vmatpush1.bf16.xpose.msra.mxu0 %v1208
    %1214 = vmatprep.subr.bf16.mxu0 0
    %1215 = vmatpush1.bf16.xpose.msra.mxu0 0
    %1216 = vmatprep.subr.bf16.mxu0 0
    %1217 = vmatpush1.bf16.xpose.msra.mxu0 0
    %1218 = vmatprep.subr.bf16.mxu0 0
    %1219 = vmatpush1.bf16.xpose.msra.mxu0 0
    %1220 = vmatprep.subr.bf16.mxu0 0
    %1221 = vmatpush1.bf16.xpose.msra.mxu0 0
    %1222 = vmatprep.subr.bf16.mxu0 0
    %1223 = vmatpush1.bf16.xpose.msra.mxu0 0
    %1224 = vmatprep.subr.bf16.mxu0 0
    %1225 = vmatpush1.bf16.xpose.msra.mxu0 0
    %1226 = vmatprep.subr.bf16.mxu0 0
    %1227 = vmatpush1.bf16.xpose.msra.mxu0 0
    %1228 = vmatprep.subr.bf16.mxu0 0
    %1229 = vmatpush1.bf16.xpose.msra.mxu0 0
    %1230 = vmatprep.subr.bf16.mxu0 0
    %1231 = vmatpush1.bf16.xpose.msra.mxu0 0
    %1232 = vmatprep.subr.bf16.mxu0 0
    %1233 = vmatpush1.bf16.xpose.msra.mxu0 0
    %1234 = vmatprep.subr.bf16.mxu0 0
    %1235 = vmatpush1.bf16.xpose.msra.mxu0 0
    %1236 = vmatprep.subr.bf16.mxu0 0
    %1237 = vmatpush1.bf16.xpose.msra.mxu0 0
    %1238 = vmatprep.subr.bf16.mxu0 0
    %1239 = vmatpush1.bf16.xpose.msra.mxu0 0
    %1240 = vmatprep.subr.bf16.mxu0 0
    %1241 = vmatpush1.bf16.xpose.msra.mxu0 0
    %1242 = vmatprep.mubr.bf16.mxu0 0
    %1243 = vmatmul.mubr.bf16.gmra.mrb[0].mxu0 %v1202
    %v1244 = vpop.f32.mrb[0].mxu0
    %v1245 = vadd.f32 %v1064, %v1244
    %v1246 = vpop.f32.mrb[0].mxu0
    %v1247 = vpop.f32.mrb[0].mxu0
    %v1248 = vadd.f32 %v1065, %v1247
    %v1249 = vpop.f32.mrb[0].mxu0
    %1250 = vdwg.mxu0
    %v1251 = vsel %vm720, %v1245, -inf
    %1252 = vmax.xlane.f32.xlu0 %v1251
    %v1253 = vpop.xlane.xlu0 %1252
    %v1254 = vsel %vm720, %v1248, -inf
    %1255 = vmax.xlane.f32.xlu0 %v1254
    %v1256 = vpop.xlane.xlu0 %1255
    %v1257 = vsub.f32 %v1245, %v1253
    %v1258 = vsub.f32 %v1248, %v1256
    %v1259 = vmul.f32 %v1257, 1.442695
    %v1260 = vpow.pop %v1259
    %v1261 = vmul.f32 %v1258, 1.442695
    %v1262 = vpow.pop %v1261
    %v1263 = vsel %vm720, %v1260, 0.0
    %1264 = vadd.xlane.f32.xlu0 %v1263
    %v1265 = vpop.xlane.xlu0 %1264
    %v1266 = vsel %vm720, %v1262, 0.0
    %1267 = vadd.xlane.f32.xlu0 %v1266
    %v1268 = vpop.xlane.xlu0 %1267
    %v1269 = vrcp.pop %v1265
    %v1270 = vmul.f32 %v1260, %v1269
    %v1271 = vrcp.pop %v1268
    %v1272 = vmul.f32 %v1262, %v1271
    %v1273 = vpack.c.bf16 %v1272, %v1270
    %1274 = vrot.lane.b32.xlu0 %v1067, 48
    %v1275 = vpop.permute.xlu0 %1274
    %1276 = vrot.lane.b32.xlu0 %v1068, 48
    %v1277 = vpop.permute.xlu0 %1276
    %v1281 = vsel %vm720, %v1273, 0
    %1283 = vmatprep.subr.bf16.mxu0 0
    %1284 = vmatpush1.bf16.msra.mxu0 %v1275
    %1285 = vmatprep.subr.bf16.mxu0 0
    %1286 = vmatpush1.bf16.msra.mxu0 %v1277
    %1287 = vmatprep.subr.bf16.mxu0 0
    %1288 = vmatpush1.bf16.msra.mxu0 0
    %1289 = vmatprep.subr.bf16.mxu0 0
    %1290 = vmatpush1.bf16.msra.mxu0 0
    %1291 = vmatprep.subr.bf16.mxu0 0
    %1292 = vmatpush1.bf16.msra.mxu0 0
    %1293 = vmatprep.subr.bf16.mxu0 0
    %1294 = vmatpush1.bf16.msra.mxu0 0
    %1295 = vmatprep.subr.bf16.mxu0 0
    %1296 = vmatpush1.bf16.msra.mxu0 0
    %1297 = vmatprep.subr.bf16.mxu0 0
    %1298 = vmatpush1.bf16.msra.mxu0 0
    %1299 = vmatprep.subr.bf16.mxu0 0
    %1300 = vmatpush1.bf16.msra.mxu0 0
    %1301 = vmatprep.subr.bf16.mxu0 0
    %1302 = vmatpush1.bf16.msra.mxu0 0
    %1303 = vmatprep.subr.bf16.mxu0 0
    %1304 = vmatpush1.bf16.msra.mxu0 0
    %1305 = vmatprep.subr.bf16.mxu0 0
    %1306 = vmatpush1.bf16.msra.mxu0 0
    %1307 = vmatprep.subr.bf16.mxu0 0
    %1308 = vmatpush1.bf16.msra.mxu0 0
    %1309 = vmatprep.subr.bf16.mxu0 0
    %1310 = vmatpush1.bf16.msra.mxu0 0
    %1311 = vmatprep.subr.bf16.mxu0 0
    %1312 = vmatpush1.bf16.msra.mxu0 0
    %1313 = vmatprep.subr.bf16.mxu0 0
    %1314 = vmatpush1.bf16.msra.mxu0 0
    %1315 = vmatprep.mubr.bf16.mxu0 0
    %1316 = vmatmul.mubr.bf16.gmra.mrb[0].mxu0 %v1281
    %v1317 = vpop.f32.mrb[0].mxu0
    %v1318 = vadd.f32 0.0, %v1317
    %v1319 = vpop.f32.mrb[0].mxu0
    %v1320 = vpop.f32.mrb[0].mxu0
    %v1321 = vadd.f32 0.0, %v1320
    %v1322 = vpop.f32.mrb[0].mxu0
    %1323 = vdwg.mxu0
    %1324 = vrot.lane.b32.xlu0 %v1066, 96
    %v1325 = vpop.permute.xlu0 %1324
    %1326 = vrot.lane.b32.xlu0 %v1067, 96
    %v1327 = vpop.permute.xlu0 %1326
    %1328 = vrot.lane.b32.xlu0 %v1068, 96
    %v1329 = vpop.permute.xlu0 %1328
    %v1331 = vsel %vm215, %v1325, 0
    %v1334 = vsel %vm215, %v1327, 0
    %v1337 = vsel %vm215, %v1329, 0
    %1339 = vmatprep.subr.bf16.mxu0 0
    %1340 = vmatpush1.bf16.xpose.msra.mxu0 %v1334
    %1341 = vmatprep.subr.bf16.mxu0 0
    %1342 = vmatpush1.bf16.xpose.msra.mxu0 %v1337
    %1343 = vmatprep.subr.bf16.mxu0 0
    %1344 = vmatpush1.bf16.xpose.msra.mxu0 0
    %1345 = vmatprep.subr.bf16.mxu0 0
    %1346 = vmatpush1.bf16.xpose.msra.mxu0 0
    %1347 = vmatprep.subr.bf16.mxu0 0
    %1348 = vmatpush1.bf16.xpose.msra.mxu0 0
    %1349 = vmatprep.subr.bf16.mxu0 0
    %1350 = vmatpush1.bf16.xpose.msra.mxu0 0
    %1351 = vmatprep.subr.bf16.mxu0 0
    %1352 = vmatpush1.bf16.xpose.msra.mxu0 0
    %1353 = vmatprep.subr.bf16.mxu0 0
    %1354 = vmatpush1.bf16.xpose.msra.mxu0 0
    %1355 = vmatprep.subr.bf16.mxu0 0
    %1356 = vmatpush1.bf16.xpose.msra.mxu0 0
    %1357 = vmatprep.subr.bf16.mxu0 0
    %1358 = vmatpush1.bf16.xpose.msra.mxu0 0
    %1359 = vmatprep.subr.bf16.mxu0 0
    %1360 = vmatpush1.bf16.xpose.msra.mxu0 0
    %1361 = vmatprep.subr.bf16.mxu0 0
    %1362 = vmatpush1.bf16.xpose.msra.mxu0 0
    %1363 = vmatprep.subr.bf16.mxu0 0
    %1364 = vmatpush1.bf16.xpose.msra.mxu0 0
    %1365 = vmatprep.subr.bf16.mxu0 0
    %1366 = vmatpush1.bf16.xpose.msra.mxu0 0
    %1367 = vmatprep.subr.bf16.mxu0 0
    %1368 = vmatpush1.bf16.xpose.msra.mxu0 0
    %1369 = vmatprep.subr.bf16.mxu0 0
    %1370 = vmatpush1.bf16.xpose.msra.mxu0 0
    %1371 = vmatprep.mubr.bf16.mxu0 0
    %1372 = vmatmul.mubr.bf16.gmra.mrb[0].mxu0 %v1331
    %v1373 = vpop.f32.mrb[0].mxu0
    %v1374 = vadd.f32 %v1064, %v1373
    %v1375 = vpop.f32.mrb[0].mxu0
    %v1376 = vpop.f32.mrb[0].mxu0
    %v1377 = vadd.f32 %v1065, %v1376
    %v1378 = vpop.f32.mrb[0].mxu0
    %1379 = vdwg.mxu0
    %v1380 = vsel %vm720, %v1374, -inf
    %1381 = vmax.xlane.f32.xlu0 %v1380
    %v1382 = vpop.xlane.xlu0 %1381
    %v1383 = vsel %vm720, %v1377, -inf
    %1384 = vmax.xlane.f32.xlu0 %v1383
    %v1385 = vpop.xlane.xlu0 %1384
    %v1386 = vsub.f32 %v1374, %v1382
    %v1387 = vsub.f32 %v1377, %v1385
    %v1388 = vmul.f32 %v1386, 1.442695
    %v1389 = vpow.pop %v1388
    %v1390 = vmul.f32 %v1387, 1.442695
    %v1391 = vpow.pop %v1390
    %v1392 = vsel %vm720, %v1389, 0.0
    %1393 = vadd.xlane.f32.xlu0 %v1392
    %v1394 = vpop.xlane.xlu0 %1393
    %v1395 = vsel %vm720, %v1391, 0.0
    %1396 = vadd.xlane.f32.xlu0 %v1395
    %v1397 = vpop.xlane.xlu0 %1396
    %v1398 = vrcp.pop %v1394
    %v1399 = vmul.f32 %v1389, %v1398
    %v1400 = vrcp.pop %v1397
    %v1401 = vmul.f32 %v1391, %v1400
    %v1402 = vpack.c.bf16 %v1401, %v1399
    %1403 = vrot.lane.b32.xlu0 %v1067, 32
    %v1404 = vpop.permute.xlu0 %1403
    %1405 = vrot.lane.b32.xlu0 %v1068, 32
    %v1406 = vpop.permute.xlu0 %1405
    %v1410 = vsel %vm720, %v1402, 0
    %1412 = vmatprep.subr.bf16.mxu0 0
    %1413 = vmatpush1.bf16.msra.mxu0 %v1404
    %1414 = vmatprep.subr.bf16.mxu0 0
    %1415 = vmatpush1.bf16.msra.mxu0 %v1406
    %1416 = vmatprep.subr.bf16.mxu0 0
    %1417 = vmatpush1.bf16.msra.mxu0 0
    %1418 = vmatprep.subr.bf16.mxu0 0
    %1419 = vmatpush1.bf16.msra.mxu0 0
    %1420 = vmatprep.subr.bf16.mxu0 0
    %1421 = vmatpush1.bf16.msra.mxu0 0
    %1422 = vmatprep.subr.bf16.mxu0 0
    %1423 = vmatpush1.bf16.msra.mxu0 0
    %1424 = vmatprep.subr.bf16.mxu0 0
    %1425 = vmatpush1.bf16.msra.mxu0 0
    %1426 = vmatprep.subr.bf16.mxu0 0
    %1427 = vmatpush1.bf16.msra.mxu0 0
    %1428 = vmatprep.subr.bf16.mxu0 0
    %1429 = vmatpush1.bf16.msra.mxu0 0
    %1430 = vmatprep.subr.bf16.mxu0 0
    %1431 = vmatpush1.bf16.msra.mxu0 0
    %1432 = vmatprep.subr.bf16.mxu0 0
    %1433 = vmatpush1.bf16.msra.mxu0 0
    %1434 = vmatprep.subr.bf16.mxu0 0
    %1435 = vmatpush1.bf16.msra.mxu0 0
    %1436 = vmatprep.subr.bf16.mxu0 0
    %1437 = vmatpush1.bf16.msra.mxu0 0
    %1438 = vmatprep.subr.bf16.mxu0 0
    %1439 = vmatpush1.bf16.msra.mxu0 0
    %1440 = vmatprep.subr.bf16.mxu0 0
    %1441 = vmatpush1.bf16.msra.mxu0 0
    %1442 = vmatprep.subr.bf16.mxu0 0
    %1443 = vmatpush1.bf16.msra.mxu0 0
    %1444 = vmatprep.mubr.bf16.mxu0 0
    %1445 = vmatmul.mubr.bf16.gmra.mrb[0].mxu0 %v1410
    %v1446 = vpop.f32.mrb[0].mxu0
    %v1447 = vadd.f32 0.0, %v1446
    %v1448 = vpop.f32.mrb[0].mxu0
    %v1449 = vpop.f32.mrb[0].mxu0
    %v1450 = vadd.f32 0.0, %v1449
    %v1451 = vpop.f32.mrb[0].mxu0
    %1452 = vdwg.mxu0
    %1453 = vrot.lane.b32.xlu0 %v1066, 80
    %v1454 = vpop.permute.xlu0 %1453
    %1455 = vrot.lane.b32.xlu0 %v1067, 80
    %v1456 = vpop.permute.xlu0 %1455
    %1457 = vrot.lane.b32.xlu0 %v1068, 80
    %v1458 = vpop.permute.xlu0 %1457
    %v1460 = vsel %vm215, %v1454, 0
    %v1463 = vsel %vm215, %v1456, 0
    %v1466 = vsel %vm215, %v1458, 0
    %1468 = vmatprep.subr.bf16.mxu0 0
    %1469 = vmatpush1.bf16.xpose.msra.mxu0 %v1463
    %1470 = vmatprep.subr.bf16.mxu0 0
    %1471 = vmatpush1.bf16.xpose.msra.mxu0 %v1466
    %1472 = vmatprep.subr.bf16.mxu0 0
    %1473 = vmatpush1.bf16.xpose.msra.mxu0 0
    %1474 = vmatprep.subr.bf16.mxu0 0
    %1475 = vmatpush1.bf16.xpose.msra.mxu0 0
    %1476 = vmatprep.subr.bf16.mxu0 0
    %1477 = vmatpush1.bf16.xpose.msra.mxu0 0
    %1478 = vmatprep.subr.bf16.mxu0 0
    %1479 = vmatpush1.bf16.xpose.msra.mxu0 0
    %1480 = vmatprep.subr.bf16.mxu0 0
    %1481 = vmatpush1.bf16.xpose.msra.mxu0 0
    %1482 = vmatprep.subr.bf16.mxu0 0
    %1483 = vmatpush1.bf16.xpose.msra.mxu0 0
    %1484 = vmatprep.subr.bf16.mxu0 0
    %1485 = vmatpush1.bf16.xpose.msra.mxu0 0
    %1486 = vmatprep.subr.bf16.mxu0 0
    %1487 = vmatpush1.bf16.xpose.msra.mxu0 0
    %1488 = vmatprep.subr.bf16.mxu0 0
    %1489 = vmatpush1.bf16.xpose.msra.mxu0 0
    %1490 = vmatprep.subr.bf16.mxu0 0
    %1491 = vmatpush1.bf16.xpose.msra.mxu0 0
    %1492 = vmatprep.subr.bf16.mxu0 0
    %1493 = vmatpush1.bf16.xpose.msra.mxu0 0
    %1494 = vmatprep.subr.bf16.mxu0 0
    %1495 = vmatpush1.bf16.xpose.msra.mxu0 0
    %1496 = vmatprep.subr.bf16.mxu0 0
    %1497 = vmatpush1.bf16.xpose.msra.mxu0 0
    %1498 = vmatprep.subr.bf16.mxu0 0
    %1499 = vmatpush1.bf16.xpose.msra.mxu0 0
    %1500 = vmatprep.mubr.bf16.mxu0 0
    %1501 = vmatmul.mubr.bf16.gmra.mrb[0].mxu0 %v1460
    %v1502 = vpop.f32.mrb[0].mxu0
    %v1503 = vadd.f32 %v1064, %v1502
    %v1504 = vpop.f32.mrb[0].mxu0
    %v1505 = vpop.f32.mrb[0].mxu0
    %v1506 = vadd.f32 %v1065, %v1505
    %v1507 = vpop.f32.mrb[0].mxu0
    %1508 = vdwg.mxu0
    %v1509 = vsel %vm720, %v1503, -inf
    %1510 = vmax.xlane.f32.xlu0 %v1509
    %v1511 = vpop.xlane.xlu0 %1510
    %v1512 = vsel %vm720, %v1506, -inf
    %1513 = vmax.xlane.f32.xlu0 %v1512
    %v1514 = vpop.xlane.xlu0 %1513
    %v1515 = vsub.f32 %v1503, %v1511
    %v1516 = vsub.f32 %v1506, %v1514
    %v1517 = vmul.f32 %v1515, 1.442695
    %v1518 = vpow.pop %v1517
    %v1519 = vmul.f32 %v1516, 1.442695
    %v1520 = vpow.pop %v1519
    %v1521 = vsel %vm720, %v1518, 0.0
    %1522 = vadd.xlane.f32.xlu0 %v1521
    %v1523 = vpop.xlane.xlu0 %1522
    %v1524 = vsel %vm720, %v1520, 0.0
    %1525 = vadd.xlane.f32.xlu0 %v1524
    %v1526 = vpop.xlane.xlu0 %1525
    %v1527 = vrcp.pop %v1523
    %v1528 = vmul.f32 %v1518, %v1527
    %v1529 = vrcp.pop %v1526
    %v1530 = vmul.f32 %v1520, %v1529
    %v1531 = vpack.c.bf16 %v1530, %v1528
    %1532 = vrot.lane.b32.xlu0 %v1067, 16
    %v1533 = vpop.permute.xlu0 %1532
    %1534 = vrot.lane.b32.xlu0 %v1068, 16
    %v1535 = vpop.permute.xlu0 %1534
    %v1539 = vsel %vm720, %v1531, 0
    %1541 = vmatprep.subr.bf16.mxu0 0
    %1542 = vmatpush1.bf16.msra.mxu0 %v1533
    %1543 = vmatprep.subr.bf16.mxu0 0
    %1544 = vmatpush1.bf16.msra.mxu0 %v1535
    %1545 = vmatprep.subr.bf16.mxu0 0
    %1546 = vmatpush1.bf16.msra.mxu0 0
    %1547 = vmatprep.subr.bf16.mxu0 0
    %1548 = vmatpush1.bf16.msra.mxu0 0
    %1549 = vmatprep.subr.bf16.mxu0 0
    %1550 = vmatpush1.bf16.msra.mxu0 0
    %1551 = vmatprep.subr.bf16.mxu0 0
    %1552 = vmatpush1.bf16.msra.mxu0 0
    %1553 = vmatprep.subr.bf16.mxu0 0
    %1554 = vmatpush1.bf16.msra.mxu0 0
    %1555 = vmatprep.subr.bf16.mxu0 0
    %1556 = vmatpush1.bf16.msra.mxu0 0
    %1557 = vmatprep.subr.bf16.mxu0 0
    %1558 = vmatpush1.bf16.msra.mxu0 0
    %1559 = vmatprep.subr.bf16.mxu0 0
    %1560 = vmatpush1.bf16.msra.mxu0 0
    %1561 = vmatprep.subr.bf16.mxu0 0
    %1562 = vmatpush1.bf16.msra.mxu0 0
    %1563 = vmatprep.subr.bf16.mxu0 0
    %1564 = vmatpush1.bf16.msra.mxu0 0
    %1565 = vmatprep.subr.bf16.mxu0 0
    %1566 = vmatpush1.bf16.msra.mxu0 0
    %1567 = vmatprep.subr.bf16.mxu0 0
    %1568 = vmatpush1.bf16.msra.mxu0 0
    %1569 = vmatprep.subr.bf16.mxu0 0
    %1570 = vmatpush1.bf16.msra.mxu0 0
    %1571 = vmatprep.subr.bf16.mxu0 0
    %1572 = vmatpush1.bf16.msra.mxu0 0
    %1573 = vmatprep.mubr.bf16.mxu0 0
    %1574 = vmatmul.mubr.bf16.gmra.mrb[0].mxu0 %v1539
    %v1575 = vpop.f32.mrb[0].mxu0
    %v1576 = vadd.f32 0.0, %v1575
    %v1577 = vpop.f32.mrb[0].mxu0
    %v1578 = vpop.f32.mrb[0].mxu0
    %v1579 = vadd.f32 0.0, %v1578
    %v1580 = vpop.f32.mrb[0].mxu0
    %1581 = vdwg.mxu0
    %1584 = vrot.lane.b32.xlu0 %v1318, 16
    %v1585 = vpop.permute.xlu0 %1584
    %1586 = vrot.lane.b32.xlu0 %v1321, 16
    %v1587 = vpop.permute.xlu0 %1586
    %1592 = vrot.lane.b32.xlu0 %v1447, 32
    %v1593 = vpop.permute.xlu0 %1592
    %1594 = vrot.lane.b32.xlu0 %v1450, 32
    %v1595 = vpop.permute.xlu0 %1594
    %1600 = vrot.lane.b32.xlu0 %v1576, 48
    %v1601 = vpop.permute.xlu0 %1600
    %1602 = vrot.lane.b32.xlu0 %v1579, 48
    %v1603 = vpop.permute.xlu0 %1602
    %v1606 = vsel %vm215, %v1188, %v1585
    %v1607 = vsel %vm215, %v1191, %v1587
    %v1608 = vsel %vm720, %v1606, %v1593
    %v1609 = vsel %vm720, %v1607, %v1595
    %v1610 = vsel %vm723, %v1608, %v1601
    %v1611 = vsel %vm723, %v1609, %v1603
    %v1612 = vpack.c.bf16 %v1611, %v1610
    %v1613 = vld [vmem:[#allocation10 + $0xc] sm:$0xf]
    %v1614 = vld [vmem:[#allocation10 + $0x24] sm:$0xf]
    %v1615 = vld [vmem:[#allocation10 + $0x3c] sm:$0xf]
    %v1616 = vld [vmem:[#allocation10 + $0x54] sm:$0xf]
    %v1617 = vld [vmem:[#allocation10 + $0x6c] sm:$0xf]
    %v1618 = vld [vmem:[#allocation10 + $0x84] sm:$0xf]
    %v1619 = vld [vmem:[#allocation10 + $0x9c] sm:$0xf]
    %v1620 = vld [vmem:[#allocation10 + $0xb4] sm:$0xf]
    %v1621 = vld [vmem:[%s6 + $0x4] ss:$0 sm:$0xff]
    %v1630 = vunpack.c.l.b16 %v1613
    %v1631 = vunpack.c.l.b16 %v1614
    %v1632 = vunpack.c.l.b16 %v1615
    %v1633 = vunpack.c.l.b16 %v1616
    %v1634 = vunpack.c.l.b16 %v1617
    %v1635 = vunpack.c.l.b16 %v1618
    %v1636 = vunpack.c.l.b16 %v1619
    %v1637 = vunpack.c.l.b16 %v1620
    %v1638 = vpack.c.b16 %v1631, %v1630
    %v1639 = vpack.c.b16 %v1633, %v1632
    %v1640 = vpack.c.b16 %v1635, %v1634
    %v1641 = vpack.c.b16 %v1637, %v1636
    %1642 = vrot.lane.b32.xlu0 %v1638, 64
    %v1643 = vpop.permute.xlu0 %1642
    %1644 = vrot.lane.b32.xlu0 %v1639, 64
    %v1645 = vpop.permute.xlu0 %1644
    %1646 = vrot.lane.b32.xlu0 %v1640, 64
    %v1647 = vpop.permute.xlu0 %1646
    %1648 = vrot.lane.b32.xlu0 %v1641, 64
    %v1649 = vpop.permute.xlu0 %1648
    %v1655 = vsel %vm161, %v1612, 0
    %1657 = vmatprep.subr.bf16.mxu0 0
    %1658 = vmatpush1.bf16.msra.mxu0 %v1643
    %1659 = vmatprep.subr.bf16.mxu0 0
    %1660 = vmatpush1.bf16.msra.mxu0 %v1645
    %1661 = vmatprep.subr.bf16.mxu0 0
    %1662 = vmatpush1.bf16.msra.mxu0 %v1647
    %1663 = vmatprep.subr.bf16.mxu0 0
    %1664 = vmatpush1.bf16.msra.mxu0 %v1649
    %1665 = vmatprep.subr.bf16.mxu0 0
    %1666 = vmatpush1.bf16.msra.mxu0 0
    %1667 = vmatprep.subr.bf16.mxu0 0
    %1668 = vmatpush1.bf16.msra.mxu0 0
    %1669 = vmatprep.subr.bf16.mxu0 0
    %1670 = vmatpush1.bf16.msra.mxu0 0
    %1671 = vmatprep.subr.bf16.mxu0 0
    %1672 = vmatpush1.bf16.msra.mxu0 0
    %1673 = vmatprep.subr.bf16.mxu0 0
    %1674 = vmatpush1.bf16.msra.mxu0 0
    %1675 = vmatprep.subr.bf16.mxu0 0
    %1676 = vmatpush1.bf16.msra.mxu0 0
    %1677 = vmatprep.subr.bf16.mxu0 0
    %1678 = vmatpush1.bf16.msra.mxu0 0
    %1679 = vmatprep.subr.bf16.mxu0 0
    %1680 = vmatpush1.bf16.msra.mxu0 0
    %1681 = vmatprep.subr.bf16.mxu0 0
    %1682 = vmatpush1.bf16.msra.mxu0 0
    %1683 = vmatprep.subr.bf16.mxu0 0
    %1684 = vmatpush1.bf16.msra.mxu0 0
    %1685 = vmatprep.subr.bf16.mxu0 0
    %1686 = vmatpush1.bf16.msra.mxu0 0
    %1687 = vmatprep.subr.bf16.mxu0 0
    %1688 = vmatpush1.bf16.msra.mxu0 0
    %1689 = vmatprep.mubr.bf16.mxu0 0
    %1690 = vmatmul.mubr.bf16.gmra.mrb[0].mxu0 %v1655
    %v1691 = vpop.f32.mrb[0].mxu0
    %v1692 = vadd.f32 %v1621, %v1691
    %v1693 = vpop.f32.mrb[0].mxu0
    %v1694 = vpop.f32.mrb[0].mxu0
    %v1695 = vadd.f32 %v1621, %v1694
    %v1696 = vpop.f32.mrb[0].mxu0
    %1697 = vdwg.mxu0
    %v1698 = vadd.f32 %v857, %v1692
    %v1699 = vadd.f32 %v858, %v1695
    %v1700 = vld [vmem:[%s6 + $0x11] ss:$0 sm:$0xff]
    %v1701 = vld [vmem:[%s6 + $0x12] ss:$0 sm:$0xff]
    %v1702 = vsel %vm161, %v1698, 0.0
    %1703 = vadd.xlane.f32.xlu0 %v1702
    %v1704 = vpop.xlane.xlu0 %1703
    %v1705 = vsel %vm161, %v1699, 0.0
    %1706 = vadd.xlane.f32.xlu0 %v1705
    %v1707 = vpop.xlane.xlu0 %1706
    %v1708 = vmul.f32 %v1704, %v822
    %v1709 = vmul.f32 %v1707, %v822
    %v1710 = vsub.f32 %v1698, %v1708
    %v1711 = vsub.f32 %v1699, %v1709
    %v1712 = vmul.f32 %v1710, %v1710
    %v1713 = vmul.f32 %v1711, %v1711
    %v1714 = vsel %vm161, %v1712, 0.0
    %1715 = vadd.xlane.f32.xlu0 %v1714
    %v1716 = vpop.xlane.xlu0 %1715
    %v1717 = vsel %vm161, %v1713, 0.0
    %1718 = vadd.xlane.f32.xlu0 %v1717
    %v1719 = vpop.xlane.xlu0 %1718
    %v1720 = vmul.f32 %v1716, %v822
    %v1721 = vmul.f32 %v1719, %v822
    %v1722 = vadd.f32 %v1720, 1e-05
    %v1723 = vadd.f32 %v1721, 1e-05
    %v1724 = vrsqrt.pop %v1722
    %v1725 = vrsqrt.pop %v1723
    %v1726 = vmul.f32 %v1710, %v1724
    %v1727 = vmul.f32 %v1711, %v1725
    %v1728 = vmul.f32 %v1726, %v1700
    %v1729 = vmul.f32 %v1727, %v1700
    %v1730 = vadd.f32 %v1728, %v1701
    %v1731 = vadd.f32 %v1729, %v1701
    %v1732 = vmul.f32 %v1730, %v850
    %v1733 = vmul.f32 %v1731, %v855
    %v1734 = vpack.c.bf16 %v1733, %v1732
    %v1735 = vld [vmem:[#allocation10 + $0x10] sm:$0xf]
    %v1736 = vld [vmem:[#allocation10 + $0x28] sm:$0xf]
    %v1737 = vld [vmem:[#allocation10 + $0x40] sm:$0xf]
    %v1738 = vld [vmem:[#allocation10 + $0x58] sm:$0xf]
    %v1739 = vld [vmem:[#allocation10 + $0x70] sm:$0xf]
    %v1740 = vld [vmem:[#allocation10 + $0x88] sm:$0xf]
    %v1741 = vld [vmem:[#allocation10 + $0xa0] sm:$0xf]
    %v1742 = vld [vmem:[#allocation10 + $0xb8] sm:$0xf]
    %v1743 = vld [vmem:[%s6 + $0x5] ss:$0 sm:$0xff]
    %v1752 = vunpack.c.l.b16 %v1735
    %v1753 = vunpack.c.l.b16 %v1736
    %v1754 = vunpack.c.l.b16 %v1737
    %v1755 = vunpack.c.l.b16 %v1738
    %v1756 = vunpack.c.l.b16 %v1739
    %v1757 = vunpack.c.l.b16 %v1740
    %v1758 = vunpack.c.l.b16 %v1741
    %v1759 = vunpack.c.l.b16 %v1742
    %v1760 = vpack.c.b16 %v1753, %v1752
    %v1761 = vpack.c.b16 %v1755, %v1754
    %v1762 = vpack.c.b16 %v1757, %v1756
    %v1763 = vpack.c.b16 %v1759, %v1758
    %v1769 = vsel %vm161, %v1734, 0
    %1771 = vmatprep.subr.bf16.mxu0 0
    %1772 = vmatpush1.bf16.msra.mxu0 %v1760
    %1773 = vmatprep.subr.bf16.mxu0 0
    %1774 = vmatpush1.bf16.msra.mxu0 %v1761
    %1775 = vmatprep.subr.bf16.mxu0 0
    %1776 = vmatpush1.bf16.msra.mxu0 %v1762
    %1777 = vmatprep.subr.bf16.mxu0 0
    %1778 = vmatpush1.bf16.msra.mxu0 %v1763
    %1779 = vmatprep.subr.bf16.mxu0 0
    %1780 = vmatpush1.bf16.msra.mxu0 0
    %1781 = vmatprep.subr.bf16.mxu0 0
    %1782 = vmatpush1.bf16.msra.mxu0 0
    %1783 = vmatprep.subr.bf16.mxu0 0
    %1784 = vmatpush1.bf16.msra.mxu0 0
    %1785 = vmatprep.subr.bf16.mxu0 0
    %1786 = vmatpush1.bf16.msra.mxu0 0
    %1787 = vmatprep.subr.bf16.mxu0 0
    %1788 = vmatpush1.bf16.msra.mxu0 0
    %1789 = vmatprep.subr.bf16.mxu0 0
    %1790 = vmatpush1.bf16.msra.mxu0 0
    %1791 = vmatprep.subr.bf16.mxu0 0
    %1792 = vmatpush1.bf16.msra.mxu0 0
    %1793 = vmatprep.subr.bf16.mxu0 0
    %1794 = vmatpush1.bf16.msra.mxu0 0
    %1795 = vmatprep.subr.bf16.mxu0 0
    %1796 = vmatpush1.bf16.msra.mxu0 0
    %1797 = vmatprep.subr.bf16.mxu0 0
    %1798 = vmatpush1.bf16.msra.mxu0 0
    %1799 = vmatprep.subr.bf16.mxu0 0
    %1800 = vmatpush1.bf16.msra.mxu0 0
    %1801 = vmatprep.subr.bf16.mxu0 0
    %1802 = vmatpush1.bf16.msra.mxu0 0
    %1803 = vmatprep.mubr.bf16.mxu0 0
    %1804 = vmatmul.mubr.bf16.gmra.mrb[0].mxu0 %v1769
    %v1805 = vpop.f32.mrb[0].mxu0
    %v1806 = vadd.f32 %v1743, %v1805
    %v1807 = vpop.f32.mrb[0].mxu0
    %v1808 = vpop.f32.mrb[0].mxu0
    %v1809 = vadd.f32 %v1743, %v1808
    %v1810 = vpop.f32.mrb[0].mxu0
    %1811 = vdwg.mxu0
    %v1812 = vmax.f32 %v1806, 0.0
    %v1813 = vmax.f32 %v1809, 0.0
    %v1814 = vpack.c.bf16 %v1813, %v1812
    %v1815 = vld [vmem:[#allocation10 + $0x14] sm:$0xf]
    %v1816 = vld [vmem:[#allocation10 + $0x2c] sm:$0xf]
    %v1817 = vld [vmem:[#allocation10 + $0x44] sm:$0xf]
    %v1818 = vld [vmem:[#allocation10 + $0x5c] sm:$0xf]
    %v1819 = vld [vmem:[#allocation10 + $0x74] sm:$0xf]
    %v1820 = vld [vmem:[#allocation10 + $0x8c] sm:$0xf]
    %v1821 = vld [vmem:[#allocation10 + $0xa4] sm:$0xf]
    %v1822 = vld [vmem:[#allocation10 + $0xbc] sm:$0xf]
    %1824 = vrot.lane.b32.xlu0 %v1814, 64
    %v1825 = vpop.permute.xlu0 %1824
    %v1834 = vunpack.c.l.b16 %v1815
    %v1835 = vunpack.c.l.b16 %v1816
    %v1836 = vunpack.c.l.b16 %v1817
    %v1837 = vunpack.c.l.b16 %v1818
    %v1838 = vunpack.c.l.b16 %v1819
    %v1839 = vunpack.c.l.b16 %v1820
    %v1840 = vunpack.c.l.b16 %v1821
    %v1841 = vunpack.c.l.b16 %v1822
    %v1842 = vpack.c.b16 %v1835, %v1834
    %v1843 = vpack.c.b16 %v1837, %v1836
    %v1844 = vpack.c.b16 %v1839, %v1838
    %v1845 = vpack.c.b16 %v1841, %v1840
    %1846 = vrot.lane.b32.xlu0 %v1842, 64
    %v1847 = vpop.permute.xlu0 %1846
    %1848 = vrot.lane.b32.xlu0 %v1843, 64
    %v1849 = vpop.permute.xlu0 %1848
    %1850 = vrot.lane.b32.xlu0 %v1844, 64
    %v1851 = vpop.permute.xlu0 %1850
    %1852 = vrot.lane.b32.xlu0 %v1845, 64
    %v1853 = vpop.permute.xlu0 %1852
    %v1859 = vsel %vm161, %v1825, 0
    %1861 = vmatprep.subr.bf16.mxu0 0
    %1862 = vmatpush1.bf16.msra.mxu0 %v1847
    %1863 = vmatprep.subr.bf16.mxu0 0
    %1864 = vmatpush1.bf16.msra.mxu0 %v1849
    %1865 = vmatprep.subr.bf16.mxu0 0
    %1866 = vmatpush1.bf16.msra.mxu0 %v1851
    %1867 = vmatprep.subr.bf16.mxu0 0
    %1868 = vmatpush1.bf16.msra.mxu0 %v1853
    %1869 = vmatprep.subr.bf16.mxu0 0
    %1870 = vmatpush1.bf16.msra.mxu0 0
    %1871 = vmatprep.subr.bf16.mxu0 0
    %1872 = vmatpush1.bf16.msra.mxu0 0
    %1873 = vmatprep.subr.bf16.mxu0 0
    %1874 = vmatpush1.bf16.msra.mxu0 0
    %1875 = vmatprep.subr.bf16.mxu0 0
    %1876 = vmatpush1.bf16.msra.mxu0 0
    %1877 = vmatprep.subr.bf16.mxu0 0
    %1878 = vmatpush1.bf16.msra.mxu0 0
    %1879 = vmatprep.subr.bf16.mxu0 0
    %1880 = vmatpush1.bf16.msra.mxu0 0
    %1881 = vmatprep.subr.bf16.mxu0 0
    %1882 = vmatpush1.bf16.msra.mxu0 0
    %1883 = vmatprep.subr.bf16.mxu0 0
    %1884 = vmatpush1.bf16.msra.mxu0 0
    %1885 = vmatprep.subr.bf16.mxu0 0
    %1886 = vmatpush1.bf16.msra.mxu0 0
    %1887 = vmatprep.subr.bf16.mxu0 0
    %1888 = vmatpush1.bf16.msra.mxu0 0
    %1889 = vmatprep.subr.bf16.mxu0 0
    %1890 = vmatpush1.bf16.msra.mxu0 0
    %1891 = vmatprep.subr.bf16.mxu0 0
    %1892 = vmatpush1.bf16.msra.mxu0 0
    %1893 = vmatprep.mubr.bf16.mxu0 0
    %1894 = vmatmul.mubr.bf16.gmra.mrb[0].mxu0 %v1859
    %v1895 = vpop.f32.mrb[0].mxu0
    %v1896 = vadd.f32 0.0, %v1895
    %v1897 = vpop.f32.mrb[0].mxu0
    %v1898 = vpop.f32.mrb[0].mxu0
    %v1899 = vadd.f32 0.0, %v1898
    %v1900 = vpop.f32.mrb[0].mxu0
    %1901 = vdwg.mxu0
    %v1907 = vsel %vm161, %v1814, 0
    %1909 = vmatprep.subr.bf16.mxu0 0
    %1910 = vmatpush1.bf16.msra.mxu0 %v1842
    %1911 = vmatprep.subr.bf16.mxu0 0
    %1912 = vmatpush1.bf16.msra.mxu0 %v1843
    %1913 = vmatprep.subr.bf16.mxu0 0
    %1914 = vmatpush1.bf16.msra.mxu0 %v1844
    %1915 = vmatprep.subr.bf16.mxu0 0
    %1916 = vmatpush1.bf16.msra.mxu0 %v1845
    %1917 = vmatprep.subr.bf16.mxu0 0
    %1918 = vmatpush1.bf16.msra.mxu0 0
    %1919 = vmatprep.subr.bf16.mxu0 0
    %1920 = vmatpush1.bf16.msra.mxu0 0
    %1921 = vmatprep.subr.bf16.mxu0 0
    %1922 = vmatpush1.bf16.msra.mxu0 0
    %1923 = vmatprep.subr.bf16.mxu0 0
    %1924 = vmatpush1.bf16.msra.mxu0 0
    %1925 = vmatprep.subr.bf16.mxu0 0
    %1926 = vmatpush1.bf16.msra.mxu0 0
    %1927 = vmatprep.subr.bf16.mxu0 0
    %1928 = vmatpush1.bf16.msra.mxu0 0
    %1929 = vmatprep.subr.bf16.mxu0 0
    %1930 = vmatpush1.bf16.msra.mxu0 0
    %1931 = vmatprep.subr.bf16.mxu0 0
    %1932 = vmatpush1.bf16.msra.mxu0 0
    %1933 = vmatprep.subr.bf16.mxu0 0
    %1934 = vmatpush1.bf16.msra.mxu0 0
    %1935 = vmatprep.subr.bf16.mxu0 0
    %1936 = vmatpush1.bf16.msra.mxu0 0
    %1937 = vmatprep.subr.bf16.mxu0 0
    %1938 = vmatpush1.bf16.msra.mxu0 0
    %1939 = vmatprep.subr.bf16.mxu0 0
    %1940 = vmatpush1.bf16.msra.mxu0 0
    %1941 = vmatprep.mubr.bf16.mxu0 0
    %1942 = vmatmul.mubr.bf16.gmra.mrb[0].mxu0 %v1907
    %v1943 = vpop.f32.mrb[0].mxu0
    %v1944 = vadd.f32 %v1896, %v1943
    %v1945 = vpop.f32.mrb[0].mxu0
    %v1946 = vpop.f32.mrb[0].mxu0
    %v1947 = vadd.f32 %v1899, %v1946
    %v1948 = vpop.f32.mrb[0].mxu0
    %1949 = vdwg.mxu0
    %v1950 = vld [vmem:[%s6 + $0x6] ss:$0 sm:$0xff]
    %v1951 = vadd.f32 %v1944, %v1950
    %v1952 = vadd.f32 %v1947, %v1950
    %v1953 = vadd.f32 %v1732, %v1951
    %v1954 = vadd.f32 %v1733, %v1952
    %v1955 = vld [vmem:[%s6 + $0x13] ss:$0 sm:$0xff]
    %v1956 = vld [vmem:[%s6 + $0x14] ss:$0 sm:$0xff]
    %v1957 = vsel %vm161, %v1953, 0.0
    %1958 = vadd.xlane.f32.xlu0 %v1957
    %v1959 = vpop.xlane.xlu0 %1958
    %v1960 = vsel %vm161, %v1954, 0.0
    %1961 = vadd.xlane.f32.xlu0 %v1960
    %v1962 = vpop.xlane.xlu0 %1961
    %v1963 = vmul.f32 %v1959, %v822
    %v1964 = vmul.f32 %v1962, %v822
    %v1965 = vsub.f32 %v1953, %v1963
    %v1966 = vsub.f32 %v1954, %v1964
    %v1967 = vmul.f32 %v1965, %v1965
    %v1968 = vmul.f32 %v1966, %v1966
    %v1969 = vsel %vm161, %v1967, 0.0
    %1970 = vadd.xlane.f32.xlu0 %v1969
    %v1971 = vpop.xlane.xlu0 %1970
    %v1972 = vsel %vm161, %v1968, 0.0
    %1973 = vadd.xlane.f32.xlu0 %v1972
    %v1974 = vpop.xlane.xlu0 %1973
    %v1975 = vmul.f32 %v1971, %v822
    %v1976 = vmul.f32 %v1974, %v822
    %v1977 = vadd.f32 %v1975, 1e-05
    %v1978 = vadd.f32 %v1976, 1e-05
    %v1979 = vrsqrt.pop %v1977
    %v1980 = vrsqrt.pop %v1978
    %v1981 = vmul.f32 %v1965, %v1979
    %v1982 = vmul.f32 %v1966, %v1980
    %v1983 = vmul.f32 %v1981, %v1955
    %v1984 = vmul.f32 %v1982, %v1955
    %v1985 = vadd.f32 %v1983, %v1956
    %v1986 = vadd.f32 %v1984, %v1956
    %1987 = vst.msk [vmem:[#allocation11] sm:$0xff] %vm161, %v1985
    %1988 = vst.msk [vmem:[#allocation11 + $0x8] sm:$0xff] %vm161, %v1986
    // Predicated region
    $region50: #{tpu_custom_call.1} parent=1 // pred_check
      _
    $region51: #{tpu_custom_call.1} parent=1 // pred_check_branch
      %1990 = sbr.rel (0) target = $region53
    $region52: #{tpu_custom_call.1} parent=1 // pred_region
      %s1992 = ssub.s32 256, 256
      %1993 = vsyncadd [#allocation4], %s1992
      %s1994 = sshll.u32 [#allocation11], 4
      %s1995 = int_to_ptr.vmem [resolvable:$true] %s1994
      %2000 = dma.vmem_to_hbm [thread:$0]  %s1995, 256, %s7, [#allocation4], 128, 128, 8
    $region53: #{tpu_custom_call.1} parent=1 // pred_fallthru
      _
    // Predicated region
    $region54: #{tpu_custom_call.1} parent=1 // pred_check
      _
    $region55: #{tpu_custom_call.1} parent=1 // pred_check_branch
      %2002 = sbr.rel (0) target = $region57
    $region56: #{tpu_custom_call.1} parent=1 // pred_region
      %2003 = dma.done [#allocation4], 256
    $region57: #{tpu_custom_call.1} parent=1 // pred_fallthru
      _
    %2004 = vsyncpa [#allocation3], 1
    %2005 = vsyncpa [#allocation6], 1
    %2006 = vsyncpa [#allocation9], 1
    %2007 = vsyncpa [#allocation4], 1

</llo_original>
